<compile_context>
chip_gen: v7x
topology: tpu7x:2x2x1
jax: 0.10.0
libtpu: 0.0.40
codegen_flags: <defaults>
</compile_context>

<pallas_src>
import math
import numpy as np
import jax
import jax.numpy as jnp
from jax import lax
from jax.experimental import pallas as pl
from jax.experimental.pallas import tpu as pltpu


# ----------------------------------------------------------------------------
# Host-side constant builders
# ----------------------------------------------------------------------------
def _adaptive_pool_matrix(in_size: int, out_size: int) -> np.ndarray:
    """P (out, in) replicating torch AdaptiveAvgPool2d along one axis."""
    P = np.zeros((out_size, in_size), dtype=np.float32)
    for i in range(out_size):
        s = (i * in_size) // out_size
        e = -((-(i + 1) * in_size) // out_size)          # ceil((i+1)*in/out)
        P[i, s:e] = 1.0 / (e - s)
    return P


def _window_select_matrix() -> np.ndarray:
    """sel (81, 25): row kk*9 + ij is one-hot at pooled pixel (i+dy, j+dx)."""
    sel = np.zeros((81, 25), dtype=np.float32)
    for dy in range(3):
        for dx in range(3):
            kk = dy * 3 + dx
            for i in range(3):
                for j in range(3):
                    sel[kk * 9 + i * 3 + j, (i + dy) * 5 + (j + dx)] = 1.0
    return sel


def _pick_bt(B: int, C: int, HW: int) -> int:
    """Batch elements per grid step."""
    bt = min(B, max(1, 256 // max(C, 1)), 8)     # ~256 lanes, bound the unroll
    if B >= 2:
        bt = min(bt, B // 2)                     # >= 2 grid steps for v7x's 2 TCs
    bt = max(bt, 1)
    # keep the double-buffered bf16 x block under ~24 MiB of VMEM
    while bt > 1 and 2 * bt * C * HW * 2 > (24 << 20):
        bt -= 1
    while B % bt:                                # Bt must divide B
        bt -= 1
    return bt


# ----------------------------------------------------------------------------
# Kernel
# ----------------------------------------------------------------------------
def _make_kernel(Bt: int, C: int):
    BtC = Bt * C

    def kernel(x_ref, poolT_ref, sel_ref,
               w1_ref, b1_ref, a1_ref,
               w2_ref, b2_ref, a2_ref,
               wf1_ref, bf1_ref, af1_ref,
               wf2_ref, bf2_ref, out_ref):
        poolT = poolT_ref[...]                               # (HW, 25) bf16
        sel = sel_ref[...]                                   # (81, 25) f32, one-hot

        # --- adaptive 5x5 avg-pool + all nine 3x3 windows --------------------
        # Standard-orientation big matmul (no transpose of the activation);
        # the NT contraction only touches the tiny (C, 25) pooled tile.
        parts = []
        for bb in range(Bt):
            pooled = jnp.dot(x_ref[bb], poolT,
                             preferred_element_type=jnp.float32)        # (C, 25)
            win_b = lax.dot_general(sel, pooled, (((1,), (1,)), ((), ())),
                                    preferred_element_type=jnp.float32)  # (81, C)
            parts.append(win_b)
        windows = parts[0] if Bt == 1 else jnp.concatenate(parts, axis=1)  # (81, BtC)

        # --- conv1: 5x5 -> 3x3 valid conv (batch-fused via block-diag W) -----
        acc1 = jnp.zeros((9, BtC), jnp.float32)
        for kk in range(9):
            acc1 = acc1 + jnp.dot(
                windows[kk * 9:(kk + 1) * 9, :].astype(jnp.bfloat16),
                w1_ref[kk], preferred_element_type=jnp.float32)
        acc1 = acc1 + b1_ref[...]
        h1 = jnp.where(acc1 >= 0, acc1, a1_ref[...] * acc1)             # PReLU

        # --- conv2: 3x3 -> 1x1 valid conv ------------------------------------
        acc2 = jnp.zeros((1, BtC), jnp.float32)
        for kk in range(9):
            acc2 = acc2 + jnp.dot(
                h1[kk:kk + 1, :].astype(jnp.bfloat16),
                w2_ref[kk], preferred_element_type=jnp.float32)
        acc2 = acc2 + b2_ref[...]
        h2 = jnp.where(acc2 >= 0, acc2, a2_ref[...] * acc2)             # (1, BtC)

        # --- gap_fc over a 1x1 map == identity; two equalized linears --------
        f1 = jnp.dot(h2.astype(jnp.bfloat16), wf1_ref[...],
                     preferred_element_type=jnp.float32) + bf1_ref[...]
        f1 = jnp.where(f1 >= 0, f1, af1_ref[...] * f1)
        f2 = jnp.dot(f1.astype(jnp.bfloat16), wf2_ref[...],
                     preferred_element_type=jnp.float32) + bf2_ref[...]
        out_ref[0] = jax.nn.sigmoid(f2)                                 # (1, BtC)

    return kernel


# ----------------------------------------------------------------------------
# Forward wrapper
# ----------------------------------------------------------------------------
def se_block_conv_forward(x_nchw, raw):
    """SEBlock_conv.forward.  x_nchw: (B, C, H, W).  Returns (B, C, 1, 1) f32."""
    B, C, H, W = x_nchw.shape
    assert H >= 5 and W >= 5                 # module asserts spatial size
    HW = H * W
    Bt = _pick_bt(B, C, HW)
    G = B // Bt
    BtC = Bt * C

    # ---- kernel-side constants (all tiny) -----------------------------------
    pool = np.kron(_adaptive_pool_matrix(H, 5), _adaptive_pool_matrix(W, 5))
    poolT = jnp.asarray(pool.T, jnp.bfloat16)                # (HW, 25)
    sel = jnp.asarray(_window_select_matrix())               # (81, 25) f32

    eye = jnp.eye(Bt, dtype=jnp.float32)

    def blockdiag(w_in_out):                                  # (C, C) -> (BtC, BtC)
        return jnp.kron(eye, w_in_out).astype(jnp.bfloat16)

    def tile_row(v):                                          # (C,) -> (1, BtC) f32
        return jnp.tile(v.astype(jnp.float32).reshape(1, C), (1, Bt))

    # conv weights: raw (C_out, C_in, 3, 3) -> per-tap (C_in, C_out) blocks.
    w1m = jnp.transpose(raw['w1'], (2, 3, 1, 0)).reshape(9, C, C)
    w2m = jnp.transpose(raw['w2'], (2, 3, 1, 0)).reshape(9, C, C)
    w1blk = jnp.stack([blockdiag(w1m[kk]) for kk in range(9)])   # (9, BtC, BtC)
    w2blk = jnp.stack([blockdiag(w2m[kk]) for kk in range(9)])
    wf1blk = blockdiag(raw['wf1'].T)                             # (BtC, BtC)
    wf2blk = blockdiag(raw['wf2'].T)

    b1t, a1t = tile_row(raw['b1']), tile_row(raw['a1'])
    b2t, a2t = tile_row(raw['b2']), tile_row(raw['a2'])
    bf1t, af1t = tile_row(raw['bf1']), tile_row(raw['af1'])
    bf2t = tile_row(raw['bf2'])

    # x: ideally already bf16 in HBM; cast here otherwise (halves the only
    # large HBM stream into the kernel).
    x = x_nchw.reshape(B, C, HW).astype(jnp.bfloat16)

    def full(arr):
        nd = arr.ndim
        return pl.BlockSpec(arr.shape, lambda i, _nd=nd: (0,) * _nd)

    const_bytes = sum(int(np.prod(a.shape)) * a.dtype.itemsize for a in
                      (poolT, sel, w1blk, w2blk, wf1blk, wf2blk,
                       b1t, a1t, b2t, a2t, bf1t, af1t, bf2t))
    x_block_bytes = Bt * C * HW * 2
    vmem_need = 2 * x_block_bytes + 2 * const_bytes + 2 * BtC * 4 + (1 << 20)
    vmem_limit = int(min(max(vmem_need, 32 << 20), 48 << 20))
    # TODO(synk): for very large H*W (x block > ~24 MiB) add an HW-reduction
    # grid axis ('arbitrary', last) with a (C, 25) f32 accumulator; matters
    # most under v7x's 64 MiB VMEM.

    flops = (2 * B * C * HW * 25               # adaptive pool
             + 2 * G * 81 * 25 * BtC           # 3x3 window expansion
             + 2 * B * C * C * (81 + 9 + 2))   # conv1 + conv2 + two FCs
    cost = pl.CostEstimate(flops=int(flops), transcendentals=int(B * C),
                           bytes_accessed=int(B * C * HW * 2 + const_bytes
                                              + B * C * 4))

    out = pl.pallas_call(
        _make_kernel(Bt, C),
        out_shape=jax.ShapeDtypeStruct((G, 1, BtC), jnp.float32),
        grid=(G,),
        in_specs=[pl.BlockSpec((Bt, C, HW), lambda i: (i, 0, 0)),
                  full(poolT), full(sel),
                  full(w1blk), full(b1t), full(a1t),
                  full(w2blk), full(b2t), full(a2t),
                  full(wf1blk), full(bf1t), full(af1t),
                  full(wf2blk), full(bf2t)],
        out_specs=pl.BlockSpec((1, 1, BtC), lambda i: (i, 0, 0)),
        compiler_params=pltpu.CompilerParams(
            dimension_semantics=("parallel",),
            vmem_limit_bytes=vmem_limit),
        cost_estimate=cost,
    )(x, poolT, sel, w1blk, b1t, a1t, w2blk, b2t, a2t,
      wf1blk, bf1t, af1t, wf2blk, bf2t)

    return out.reshape(B, C, 1, 1)


# ----------------------------------------------------------------------------
# Parameters (matching the PyTorch equalized init) and pure-JAX reference
# ----------------------------------------------------------------------------
def init_params(key, C: int):
    ks = jax.random.split(key, 6)
    c_conv = 1.0 / math.sqrt(C * 3 * 3)      # EqualizedWeight scale (conv)
    c_fc = 1.0 / math.sqrt(C)                # EqualizedWeight scale (linear)
    return dict(
        w1=jax.random.normal(ks[0], (C, C, 3, 3), jnp.float32) * c_conv,
        b1=jax.random.normal(ks[1], (C,), jnp.float32),
        w2=jax.random.normal(ks[2], (C, C, 3, 3), jnp.float32) * c_conv,
        b2=jax.random.normal(ks[3], (C,), jnp.float32),
        wf1=jax.random.normal(ks[4], (C, C), jnp.float32) * c_fc,  # (out, in)
        bf1=jnp.zeros((C,), jnp.float32),      # EqualizedLinear bias init * 0.0
        wf2=jax.random.normal(ks[5], (C, C), jnp.float32) * c_fc,
        bf2=jnp.zeros((C,), jnp.float32),
        a1=jnp.full((C,), 0.25, jnp.float32),  # nn.PReLU default slope
        a2=jnp.full((C,), 0.25, jnp.float32),
        af1=jnp.full((C,), 0.25, jnp.float32),
    )


def reference(x, raw, H: int, W: int):
    """Pure-JAX reference of SEBlock_conv.forward (NCHW, f32)."""
    B, C = x.shape[0], x.shape[1]
    Ph = jnp.asarray(_adaptive_pool_matrix(H, 5))
    Pw = jnp.asarray(_adaptive_pool_matrix(W, 5))
    xp = jnp.einsum('ph,bchw,qw->bcpq', Ph, x, Pw)

    def conv(z, w, b):
        out = lax.conv_general_dilated(
            z, w, (1, 1), 'VALID', dimension_numbers=('NCHW', 'OIHW', 'NCHW'))
        return out + b.reshape(1, -1, 1, 1)

    def prelu4(z, a):
        return jnp.where(z >= 0, z, a.reshape(1, -1, 1, 1) * z)

    h = prelu4(conv(xp, raw['w1'], raw['b1']), raw['a1'])
    h = prelu4(conv(h, raw['w2'], raw['b2']), raw['a2'])
    v = jnp.mean(h, axis=(2, 3))                       # gap_fc on 1x1 map
    v = v @ raw['wf1'].T + raw['bf1']
    v = jnp.where(v >= 0, v, raw['af1'].reshape(1, -1) * v)
    v = v @ raw['wf2'].T + raw['bf2']
    return jax.nn.sigmoid(v).reshape(B, C, 1, 1)


# ----------------------------------------------------------------------------
if __name__ == "__main__":
    B, C, H, W = 2, 4, 16, 16
    key = jax.random.PRNGKey(0)
    kx, kp = jax.random.split(key)
    x = jax.random.normal(kx, (B, C, H, W), jnp.float32)
    raw = init_params(kp, C)

    out = jax.block_until_ready(se_block_conv_forward(x, raw))
    ref = np.asarray(reference(x, raw, H, W))

    assert out.shape == (B, C, 1, 1)
    # bf16 MXU operands with f32 accumulation: ~1e-2 headroom is ample here.
    np.testing.assert_allclose(np.asarray(out), ref, rtol=2e-2, atol=2e-2)
    print("KERNEL_OK")
</pallas_src>

<mosaic_0001>
module attributes {stable_mosaic.version = 11 : i64} {
  func.func @kernel(%arg0: i32, %arg1: memref<1x4x256xbf16, #tpu.memory_space<vmem>>, %arg2: memref<256x25xbf16, #tpu.memory_space<vmem>>, %arg3: memref<81x25xf32, #tpu.memory_space<vmem>>, %arg4: memref<9x4x4xbf16, #tpu.memory_space<vmem>>, %arg5: memref<1x4xf32, #tpu.memory_space<vmem>>, %arg6: memref<1x4xf32, #tpu.memory_space<vmem>>, %arg7: memref<9x4x4xbf16, #tpu.memory_space<vmem>>, %arg8: memref<1x4xf32, #tpu.memory_space<vmem>>, %arg9: memref<1x4xf32, #tpu.memory_space<vmem>>, %arg10: memref<4x4xbf16, #tpu.memory_space<vmem>>, %arg11: memref<1x4xf32, #tpu.memory_space<vmem>>, %arg12: memref<1x4xf32, #tpu.memory_space<vmem>>, %arg13: memref<4x4xbf16, #tpu.memory_space<vmem>>, %arg14: memref<1x4xf32, #tpu.memory_space<vmem>>, %arg15: memref<1x1x4xf32, #tpu.memory_space<vmem>>) attributes {dimension_semantics = [#tpu.dimension_semantics<parallel>], iteration_bounds = array<i64: 2>, scalar_prefetch = 0 : i64, scratch_operands = 0 : i64, tpu.core_type = #tpu.core_type<tc>, window_params = [{transform_indices = @transform_0, window_bounds = array<i64: 1, 4, 256>}, {pipeline_mode = #tpu.pipeline_mode<synchronous>, transform_indices = @transform_1, window_bounds = array<i64: 256, 25>}, {pipeline_mode = #tpu.pipeline_mode<synchronous>, transform_indices = @transform_2, window_bounds = array<i64: 81, 25>}, {pipeline_mode = #tpu.pipeline_mode<synchronous>, transform_indices = @transform_3, window_bounds = array<i64: 9, 4, 4>}, {pipeline_mode = #tpu.pipeline_mode<synchronous>, transform_indices = @transform_4, window_bounds = array<i64: 1, 4>}, {pipeline_mode = #tpu.pipeline_mode<synchronous>, transform_indices = @transform_5, window_bounds = array<i64: 1, 4>}, {pipeline_mode = #tpu.pipeline_mode<synchronous>, transform_indices = @transform_6, window_bounds = array<i64: 9, 4, 4>}, {pipeline_mode = #tpu.pipeline_mode<synchronous>, transform_indices = @transform_7, window_bounds = array<i64: 1, 4>}, {pipeline_mode = #tpu.pipeline_mode<synchronous>, transform_indices = @transform_8, window_bounds = array<i64: 1, 4>}, {pipeline_mode = #tpu.pipeline_mode<synchronous>, transform_indices = @transform_9, window_bounds = array<i64: 4, 4>}, {pipeline_mode = #tpu.pipeline_mode<synchronous>, transform_indices = @transform_10, window_bounds = array<i64: 1, 4>}, {pipeline_mode = #tpu.pipeline_mode<synchronous>, transform_indices = @transform_11, window_bounds = array<i64: 1, 4>}, {pipeline_mode = #tpu.pipeline_mode<synchronous>, transform_indices = @transform_12, window_bounds = array<i64: 4, 4>}, {pipeline_mode = #tpu.pipeline_mode<synchronous>, transform_indices = @transform_13, window_bounds = array<i64: 1, 4>}, {transform_indices = @transform_14, window_bounds = array<i64: 1, 1, 4>}]} {
    %c0 = arith.constant 0 : index
    %c0_0 = arith.constant 0 : index
    %0 = vector.load %arg2[%c0, %c0_0] : memref<256x25xbf16, #tpu.memory_space<vmem>>, vector<256x25xbf16>
    %c0_1 = arith.constant 0 : index
    %c0_2 = arith.constant 0 : index
    %1 = vector.load %arg3[%c0_1, %c0_2] : memref<81x25xf32, #tpu.memory_space<vmem>>, vector<81x25xf32>
    %c0_3 = arith.constant 0 : index
    %c0_4 = arith.constant 0 : index
    %c0_5 = arith.constant 0 : index
    %2 = vector.load %arg1[%c0_3, %c0_4, %c0_5] : memref<1x4x256xbf16, #tpu.memory_space<vmem>>, vector<1x4x256xbf16>
    %3 = vector.shape_cast %2 : vector<1x4x256xbf16> to vector<4x256xbf16>
    %cst = arith.constant dense<0.000000e+00> : vector<4x25xf32>
    %4 = tpu.matmul %3, %0, %cst {dimension_numbers = #tpu.dot_dimension_numbers<[1], [0], [0], [1], [0, 0, 1, 1], [], []>} : vector<4x256xbf16>, vector<256x25xbf16>, vector<4x25xf32> -> vector<4x25xf32>
    %cst_6 = arith.constant dense<0.000000e+00> : vector<81x4xf32>
    %5 = tpu.matmul %1, %4, %cst_6 {dimension_numbers = #tpu.dot_dimension_numbers<[1], [1], [0], [0], [0, 0, 1, 0], [], []>} : vector<81x25xf32>, vector<4x25xf32>, vector<81x4xf32> -> vector<81x4xf32>
    %cst_7 = arith.constant 0.000000e+00 : f32
    %6 = vector.broadcast %cst_7 : f32 to vector<9x4xf32>
    %7 = vector.extract_strided_slice %5 {offsets = [0, 0], sizes = [9, 4], strides = [1, 1]} : vector<81x4xf32> to vector<9x4xf32>
    %8 = arith.truncf %7 : vector<9x4xf32> to vector<9x4xbf16>
    %c0_8 = arith.constant 0 : index
    %c0_9 = arith.constant 0 : index
    %c0_10 = arith.constant 0 : index
    %9 = vector.load %arg4[%c0_8, %c0_9, %c0_10] : memref<9x4x4xbf16, #tpu.memory_space<vmem>>, vector<1x4x4xbf16>
    %10 = vector.shape_cast %9 : vector<1x4x4xbf16> to vector<4x4xbf16>
    %cst_11 = arith.constant dense<0.000000e+00> : vector<9x4xf32>
    %11 = tpu.matmul %8, %10, %cst_11 {dimension_numbers = #tpu.dot_dimension_numbers<[1], [0], [0], [1], [0, 0, 1, 1], [], []>} : vector<9x4xbf16>, vector<4x4xbf16>, vector<9x4xf32> -> vector<9x4xf32>
    %12 = arith.addf %6, %11 : vector<9x4xf32>
    %13 = vector.extract_strided_slice %5 {offsets = [9, 0], sizes = [9, 4], strides = [1, 1]} : vector<81x4xf32> to vector<9x4xf32>
    %14 = arith.truncf %13 : vector<9x4xf32> to vector<9x4xbf16>
    %c1 = arith.constant 1 : index
    %c0_12 = arith.constant 0 : index
    %c0_13 = arith.constant 0 : index
    %15 = vector.load %arg4[%c1, %c0_12, %c0_13] : memref<9x4x4xbf16, #tpu.memory_space<vmem>>, vector<1x4x4xbf16>
    %16 = vector.shape_cast %15 : vector<1x4x4xbf16> to vector<4x4xbf16>
    %cst_14 = arith.constant dense<0.000000e+00> : vector<9x4xf32>
    %17 = tpu.matmul %14, %16, %cst_14 {dimension_numbers = #tpu.dot_dimension_numbers<[1], [0], [0], [1], [0, 0, 1, 1], [], []>} : vector<9x4xbf16>, vector<4x4xbf16>, vector<9x4xf32> -> vector<9x4xf32>
    %18 = arith.addf %12, %17 : vector<9x4xf32>
    %19 = vector.extract_strided_slice %5 {offsets = [18, 0], sizes = [9, 4], strides = [1, 1]} : vector<81x4xf32> to vector<9x4xf32>
    %20 = arith.truncf %19 : vector<9x4xf32> to vector<9x4xbf16>
    %c2 = arith.constant 2 : index
    %c0_15 = arith.constant 0 : index
    %c0_16 = arith.constant 0 : index
    %21 = vector.load %arg4[%c2, %c0_15, %c0_16] : memref<9x4x4xbf16, #tpu.memory_space<vmem>>, vector<1x4x4xbf16>
    %22 = vector.shape_cast %21 : vector<1x4x4xbf16> to vector<4x4xbf16>
    %cst_17 = arith.constant dense<0.000000e+00> : vector<9x4xf32>
    %23 = tpu.matmul %20, %22, %cst_17 {dimension_numbers = #tpu.dot_dimension_numbers<[1], [0], [0], [1], [0, 0, 1, 1], [], []>} : vector<9x4xbf16>, vector<4x4xbf16>, vector<9x4xf32> -> vector<9x4xf32>
    %24 = arith.addf %18, %23 : vector<9x4xf32>
    %25 = vector.extract_strided_slice %5 {offsets = [27, 0], sizes = [9, 4], strides = [1, 1]} : vector<81x4xf32> to vector<9x4xf32>
    %26 = arith.truncf %25 : vector<9x4xf32> to vector<9x4xbf16>
    %c3 = arith.constant 3 : index
    %c0_18 = arith.constant 0 : index
    %c0_19 = arith.constant 0 : index
    %27 = vector.load %arg4[%c3, %c0_18, %c0_19] : memref<9x4x4xbf16, #tpu.memory_space<vmem>>, vector<1x4x4xbf16>
    %28 = vector.shape_cast %27 : vector<1x4x4xbf16> to vector<4x4xbf16>
    %cst_20 = arith.constant dense<0.000000e+00> : vector<9x4xf32>
    %29 = tpu.matmul %26, %28, %cst_20 {dimension_numbers = #tpu.dot_dimension_numbers<[1], [0], [0], [1], [0, 0, 1, 1], [], []>} : vector<9x4xbf16>, vector<4x4xbf16>, vector<9x4xf32> -> vector<9x4xf32>
    %30 = arith.addf %24, %29 : vector<9x4xf32>
    %31 = vector.extract_strided_slice %5 {offsets = [36, 0], sizes = [9, 4], strides = [1, 1]} : vector<81x4xf32> to vector<9x4xf32>
    %32 = arith.truncf %31 : vector<9x4xf32> to vector<9x4xbf16>
    %c4 = arith.constant 4 : index
    %c0_21 = arith.constant 0 : index
    %c0_22 = arith.constant 0 : index
    %33 = vector.load %arg4[%c4, %c0_21, %c0_22] : memref<9x4x4xbf16, #tpu.memory_space<vmem>>, vector<1x4x4xbf16>
    %34 = vector.shape_cast %33 : vector<1x4x4xbf16> to vector<4x4xbf16>
    %cst_23 = arith.constant dense<0.000000e+00> : vector<9x4xf32>
    %35 = tpu.matmul %32, %34, %cst_23 {dimension_numbers = #tpu.dot_dimension_numbers<[1], [0], [0], [1], [0, 0, 1, 1], [], []>} : vector<9x4xbf16>, vector<4x4xbf16>, vector<9x4xf32> -> vector<9x4xf32>
    %36 = arith.addf %30, %35 : vector<9x4xf32>
    %37 = vector.extract_strided_slice %5 {offsets = [45, 0], sizes = [9, 4], strides = [1, 1]} : vector<81x4xf32> to vector<9x4xf32>
    %38 = arith.truncf %37 : vector<9x4xf32> to vector<9x4xbf16>
    %c5 = arith.constant 5 : index
    %c0_24 = arith.constant 0 : index
    %c0_25 = arith.constant 0 : index
    %39 = vector.load %arg4[%c5, %c0_24, %c0_25] : memref<9x4x4xbf16, #tpu.memory_space<vmem>>, vector<1x4x4xbf16>
    %40 = vector.shape_cast %39 : vector<1x4x4xbf16> to vector<4x4xbf16>
    %cst_26 = arith.constant dense<0.000000e+00> : vector<9x4xf32>
    %41 = tpu.matmul %38, %40, %cst_26 {dimension_numbers = #tpu.dot_dimension_numbers<[1], [0], [0], [1], [0, 0, 1, 1], [], []>} : vector<9x4xbf16>, vector<4x4xbf16>, vector<9x4xf32> -> vector<9x4xf32>
    %42 = arith.addf %36, %41 : vector<9x4xf32>
    %43 = vector.extract_strided_slice %5 {offsets = [54, 0], sizes = [9, 4], strides = [1, 1]} : vector<81x4xf32> to vector<9x4xf32>
    %44 = arith.truncf %43 : vector<9x4xf32> to vector<9x4xbf16>
    %c6 = arith.constant 6 : index
    %c0_27 = arith.constant 0 : index
    %c0_28 = arith.constant 0 : index
    %45 = vector.load %arg4[%c6, %c0_27, %c0_28] : memref<9x4x4xbf16, #tpu.memory_space<vmem>>, vector<1x4x4xbf16>
    %46 = vector.shape_cast %45 : vector<1x4x4xbf16> to vector<4x4xbf16>
    %cst_29 = arith.constant dense<0.000000e+00> : vector<9x4xf32>
    %47 = tpu.matmul %44, %46, %cst_29 {dimension_numbers = #tpu.dot_dimension_numbers<[1], [0], [0], [1], [0, 0, 1, 1], [], []>} : vector<9x4xbf16>, vector<4x4xbf16>, vector<9x4xf32> -> vector<9x4xf32>
    %48 = arith.addf %42, %47 : vector<9x4xf32>
    %49 = vector.extract_strided_slice %5 {offsets = [63, 0], sizes = [9, 4], strides = [1, 1]} : vector<81x4xf32> to vector<9x4xf32>
    %50 = arith.truncf %49 : vector<9x4xf32> to vector<9x4xbf16>
    %c7 = arith.constant 7 : index
    %c0_30 = arith.constant 0 : index
    %c0_31 = arith.constant 0 : index
    %51 = vector.load %arg4[%c7, %c0_30, %c0_31] : memref<9x4x4xbf16, #tpu.memory_space<vmem>>, vector<1x4x4xbf16>
    %52 = vector.shape_cast %51 : vector<1x4x4xbf16> to vector<4x4xbf16>
    %cst_32 = arith.constant dense<0.000000e+00> : vector<9x4xf32>
    %53 = tpu.matmul %50, %52, %cst_32 {dimension_numbers = #tpu.dot_dimension_numbers<[1], [0], [0], [1], [0, 0, 1, 1], [], []>} : vector<9x4xbf16>, vector<4x4xbf16>, vector<9x4xf32> -> vector<9x4xf32>
    %54 = arith.addf %48, %53 : vector<9x4xf32>
    %55 = vector.extract_strided_slice %5 {offsets = [72, 0], sizes = [9, 4], strides = [1, 1]} : vector<81x4xf32> to vector<9x4xf32>
    %56 = arith.truncf %55 : vector<9x4xf32> to vector<9x4xbf16>
    %c8 = arith.constant 8 : index
    %c0_33 = arith.constant 0 : index
    %c0_34 = arith.constant 0 : index
    %57 = vector.load %arg4[%c8, %c0_33, %c0_34] : memref<9x4x4xbf16, #tpu.memory_space<vmem>>, vector<1x4x4xbf16>
    %58 = vector.shape_cast %57 : vector<1x4x4xbf16> to vector<4x4xbf16>
    %cst_35 = arith.constant dense<0.000000e+00> : vector<9x4xf32>
    %59 = tpu.matmul %56, %58, %cst_35 {dimension_numbers = #tpu.dot_dimension_numbers<[1], [0], [0], [1], [0, 0, 1, 1], [], []>} : vector<9x4xbf16>, vector<4x4xbf16>, vector<9x4xf32> -> vector<9x4xf32>
    %60 = arith.addf %54, %59 : vector<9x4xf32>
    %c0_36 = arith.constant 0 : index
    %c0_37 = arith.constant 0 : index
    %61 = vector.load %arg5[%c0_36, %c0_37] : memref<1x4xf32, #tpu.memory_space<vmem>>, vector<1x4xf32>
    %62 = vector.broadcast %61 : vector<1x4xf32> to vector<9x4xf32>
    %63 = arith.addf %60, %62 : vector<9x4xf32>
    %cst_38 = arith.constant 0.000000e+00 : f32
    %64 = vector.broadcast %cst_38 : f32 to vector<9x4xf32>
    %65 = arith.cmpf oge, %63, %64 : vector<9x4xf32>
    %c0_39 = arith.constant 0 : index
    %c0_40 = arith.constant 0 : index
    %66 = vector.load %arg6[%c0_39, %c0_40] : memref<1x4xf32, #tpu.memory_space<vmem>>, vector<1x4xf32>
    %67 = vector.broadcast %66 : vector<1x4xf32> to vector<9x4xf32>
    %68 = arith.mulf %67, %63 : vector<9x4xf32>
    %69 = arith.select %65, %63, %68 : vector<9x4xi1>, vector<9x4xf32>
    %cst_41 = arith.constant 0.000000e+00 : f32
    %70 = vector.broadcast %cst_41 : f32 to vector<1x4xf32>
    %71 = vector.extract_strided_slice %69 {offsets = [0, 0], sizes = [1, 4], strides = [1, 1]} : vector<9x4xf32> to vector<1x4xf32>
    %72 = arith.truncf %71 : vector<1x4xf32> to vector<1x4xbf16>
    %c0_42 = arith.constant 0 : index
    %c0_43 = arith.constant 0 : index
    %c0_44 = arith.constant 0 : index
    %73 = vector.load %arg7[%c0_42, %c0_43, %c0_44] : memref<9x4x4xbf16, #tpu.memory_space<vmem>>, vector<1x4x4xbf16>
    %74 = vector.shape_cast %73 : vector<1x4x4xbf16> to vector<4x4xbf16>
    %cst_45 = arith.constant dense<0.000000e+00> : vector<1x4xf32>
    %75 = tpu.matmul %72, %74, %cst_45 {dimension_numbers = #tpu.dot_dimension_numbers<[1], [0], [0], [1], [0, 0, 1, 1], [], []>} : vector<1x4xbf16>, vector<4x4xbf16>, vector<1x4xf32> -> vector<1x4xf32>
    %76 = arith.addf %70, %75 : vector<1x4xf32>
    %77 = vector.extract_strided_slice %69 {offsets = [1, 0], sizes = [1, 4], strides = [1, 1]} : vector<9x4xf32> to vector<1x4xf32>
    %78 = arith.truncf %77 : vector<1x4xf32> to vector<1x4xbf16>
    %c1_46 = arith.constant 1 : index
    %c0_47 = arith.constant 0 : index
    %c0_48 = arith.constant 0 : index
    %79 = vector.load %arg7[%c1_46, %c0_47, %c0_48] : memref<9x4x4xbf16, #tpu.memory_space<vmem>>, vector<1x4x4xbf16>
    %80 = vector.shape_cast %79 : vector<1x4x4xbf16> to vector<4x4xbf16>
    %cst_49 = arith.constant dense<0.000000e+00> : vector<1x4xf32>
    %81 = tpu.matmul %78, %80, %cst_49 {dimension_numbers = #tpu.dot_dimension_numbers<[1], [0], [0], [1], [0, 0, 1, 1], [], []>} : vector<1x4xbf16>, vector<4x4xbf16>, vector<1x4xf32> -> vector<1x4xf32>
    %82 = arith.addf %76, %81 : vector<1x4xf32>
    %83 = vector.extract_strided_slice %69 {offsets = [2, 0], sizes = [1, 4], strides = [1, 1]} : vector<9x4xf32> to vector<1x4xf32>
    %84 = arith.truncf %83 : vector<1x4xf32> to vector<1x4xbf16>
    %c2_50 = arith.constant 2 : index
    %c0_51 = arith.constant 0 : index
    %c0_52 = arith.constant 0 : index
    %85 = vector.load %arg7[%c2_50, %c0_51, %c0_52] : memref<9x4x4xbf16, #tpu.memory_space<vmem>>, vector<1x4x4xbf16>
    %86 = vector.shape_cast %85 : vector<1x4x4xbf16> to vector<4x4xbf16>
    %cst_53 = arith.constant dense<0.000000e+00> : vector<1x4xf32>
    %87 = tpu.matmul %84, %86, %cst_53 {dimension_numbers = #tpu.dot_dimension_numbers<[1], [0], [0], [1], [0, 0, 1, 1], [], []>} : vector<1x4xbf16>, vector<4x4xbf16>, vector<1x4xf32> -> vector<1x4xf32>
    %88 = arith.addf %82, %87 : vector<1x4xf32>
    %89 = vector.extract_strided_slice %69 {offsets = [3, 0], sizes = [1, 4], strides = [1, 1]} : vector<9x4xf32> to vector<1x4xf32>
    %90 = arith.truncf %89 : vector<1x4xf32> to vector<1x4xbf16>
    %c3_54 = arith.constant 3 : index
    %c0_55 = arith.constant 0 : index
    %c0_56 = arith.constant 0 : index
    %91 = vector.load %arg7[%c3_54, %c0_55, %c0_56] : memref<9x4x4xbf16, #tpu.memory_space<vmem>>, vector<1x4x4xbf16>
    %92 = vector.shape_cast %91 : vector<1x4x4xbf16> to vector<4x4xbf16>
    %cst_57 = arith.constant dense<0.000000e+00> : vector<1x4xf32>
    %93 = tpu.matmul %90, %92, %cst_57 {dimension_numbers = #tpu.dot_dimension_numbers<[1], [0], [0], [1], [0, 0, 1, 1], [], []>} : vector<1x4xbf16>, vector<4x4xbf16>, vector<1x4xf32> -> vector<1x4xf32>
    %94 = arith.addf %88, %93 : vector<1x4xf32>
    %95 = vector.extract_strided_slice %69 {offsets = [4, 0], sizes = [1, 4], strides = [1, 1]} : vector<9x4xf32> to vector<1x4xf32>
    %96 = arith.truncf %95 : vector<1x4xf32> to vector<1x4xbf16>
    %c4_58 = arith.constant 4 : index
    %c0_59 = arith.constant 0 : index
    %c0_60 = arith.constant 0 : index
    %97 = vector.load %arg7[%c4_58, %c0_59, %c0_60] : memref<9x4x4xbf16, #tpu.memory_space<vmem>>, vector<1x4x4xbf16>
    %98 = vector.shape_cast %97 : vector<1x4x4xbf16> to vector<4x4xbf16>
    %cst_61 = arith.constant dense<0.000000e+00> : vector<1x4xf32>
    %99 = tpu.matmul %96, %98, %cst_61 {dimension_numbers = #tpu.dot_dimension_numbers<[1], [0], [0], [1], [0, 0, 1, 1], [], []>} : vector<1x4xbf16>, vector<4x4xbf16>, vector<1x4xf32> -> vector<1x4xf32>
    %100 = arith.addf %94, %99 : vector<1x4xf32>
    %101 = vector.extract_strided_slice %69 {offsets = [5, 0], sizes = [1, 4], strides = [1, 1]} : vector<9x4xf32> to vector<1x4xf32>
    %102 = arith.truncf %101 : vector<1x4xf32> to vector<1x4xbf16>
    %c5_62 = arith.constant 5 : index
    %c0_63 = arith.constant 0 : index
    %c0_64 = arith.constant 0 : index
    %103 = vector.load %arg7[%c5_62, %c0_63, %c0_64] : memref<9x4x4xbf16, #tpu.memory_space<vmem>>, vector<1x4x4xbf16>
    %104 = vector.shape_cast %103 : vector<1x4x4xbf16> to vector<4x4xbf16>
    %cst_65 = arith.constant dense<0.000000e+00> : vector<1x4xf32>
    %105 = tpu.matmul %102, %104, %cst_65 {dimension_numbers = #tpu.dot_dimension_numbers<[1], [0], [0], [1], [0, 0, 1, 1], [], []>} : vector<1x4xbf16>, vector<4x4xbf16>, vector<1x4xf32> -> vector<1x4xf32>
    %106 = arith.addf %100, %105 : vector<1x4xf32>
    %107 = vector.extract_strided_slice %69 {offsets = [6, 0], sizes = [1, 4], strides = [1, 1]} : vector<9x4xf32> to vector<1x4xf32>
    %108 = arith.truncf %107 : vector<1x4xf32> to vector<1x4xbf16>
    %c6_66 = arith.constant 6 : index
    %c0_67 = arith.constant 0 : index
    %c0_68 = arith.constant 0 : index
    %109 = vector.load %arg7[%c6_66, %c0_67, %c0_68] : memref<9x4x4xbf16, #tpu.memory_space<vmem>>, vector<1x4x4xbf16>
    %110 = vector.shape_cast %109 : vector<1x4x4xbf16> to vector<4x4xbf16>
    %cst_69 = arith.constant dense<0.000000e+00> : vector<1x4xf32>
    %111 = tpu.matmul %108, %110, %cst_69 {dimension_numbers = #tpu.dot_dimension_numbers<[1], [0], [0], [1], [0, 0, 1, 1], [], []>} : vector<1x4xbf16>, vector<4x4xbf16>, vector<1x4xf32> -> vector<1x4xf32>
    %112 = arith.addf %106, %111 : vector<1x4xf32>
    %113 = vector.extract_strided_slice %69 {offsets = [7, 0], sizes = [1, 4], strides = [1, 1]} : vector<9x4xf32> to vector<1x4xf32>
    %114 = arith.truncf %113 : vector<1x4xf32> to vector<1x4xbf16>
    %c7_70 = arith.constant 7 : index
    %c0_71 = arith.constant 0 : index
    %c0_72 = arith.constant 0 : index
    %115 = vector.load %arg7[%c7_70, %c0_71, %c0_72] : memref<9x4x4xbf16, #tpu.memory_space<vmem>>, vector<1x4x4xbf16>
    %116 = vector.shape_cast %115 : vector<1x4x4xbf16> to vector<4x4xbf16>
    %cst_73 = arith.constant dense<0.000000e+00> : vector<1x4xf32>
    %117 = tpu.matmul %114, %116, %cst_73 {dimension_numbers = #tpu.dot_dimension_numbers<[1], [0], [0], [1], [0, 0, 1, 1], [], []>} : vector<1x4xbf16>, vector<4x4xbf16>, vector<1x4xf32> -> vector<1x4xf32>
    %118 = arith.addf %112, %117 : vector<1x4xf32>
    %119 = vector.extract_strided_slice %69 {offsets = [8, 0], sizes = [1, 4], strides = [1, 1]} : vector<9x4xf32> to vector<1x4xf32>
    %120 = arith.truncf %119 : vector<1x4xf32> to vector<1x4xbf16>
    %c8_74 = arith.constant 8 : index
    %c0_75 = arith.constant 0 : index
    %c0_76 = arith.constant 0 : index
    %121 = vector.load %arg7[%c8_74, %c0_75, %c0_76] : memref<9x4x4xbf16, #tpu.memory_space<vmem>>, vector<1x4x4xbf16>
    %122 = vector.shape_cast %121 : vector<1x4x4xbf16> to vector<4x4xbf16>
    %cst_77 = arith.constant dense<0.000000e+00> : vector<1x4xf32>
    %123 = tpu.matmul %120, %122, %cst_77 {dimension_numbers = #tpu.dot_dimension_numbers<[1], [0], [0], [1], [0, 0, 1, 1], [], []>} : vector<1x4xbf16>, vector<4x4xbf16>, vector<1x4xf32> -> vector<1x4xf32>
    %124 = arith.addf %118, %123 : vector<1x4xf32>
    %c0_78 = arith.constant 0 : index
    %c0_79 = arith.constant 0 : index
    %125 = vector.load %arg8[%c0_78, %c0_79] : memref<1x4xf32, #tpu.memory_space<vmem>>, vector<1x4xf32>
    %126 = arith.addf %124, %125 : vector<1x4xf32>
    %cst_80 = arith.constant 0.000000e+00 : f32
    %127 = vector.broadcast %cst_80 : f32 to vector<1x4xf32>
    %128 = arith.cmpf oge, %126, %127 : vector<1x4xf32>
    %c0_81 = arith.constant 0 : index
    %c0_82 = arith.constant 0 : index
    %129 = vector.load %arg9[%c0_81, %c0_82] : memref<1x4xf32, #tpu.memory_space<vmem>>, vector<1x4xf32>
    %130 = arith.mulf %129, %126 : vector<1x4xf32>
    %131 = arith.select %128, %126, %130 : vector<1x4xi1>, vector<1x4xf32>
    %132 = arith.truncf %131 : vector<1x4xf32> to vector<1x4xbf16>
    %c0_83 = arith.constant 0 : index
    %c0_84 = arith.constant 0 : index
    %133 = vector.load %arg10[%c0_83, %c0_84] : memref<4x4xbf16, #tpu.memory_space<vmem>>, vector<4x4xbf16>
    %cst_85 = arith.constant dense<0.000000e+00> : vector<1x4xf32>
    %134 = tpu.matmul %132, %133, %cst_85 {dimension_numbers = #tpu.dot_dimension_numbers<[1], [0], [0], [1], [0, 0, 1, 1], [], []>} : vector<1x4xbf16>, vector<4x4xbf16>, vector<1x4xf32> -> vector<1x4xf32>
    %c0_86 = arith.constant 0 : index
    %c0_87 = arith.constant 0 : index
    %135 = vector.load %arg11[%c0_86, %c0_87] : memref<1x4xf32, #tpu.memory_space<vmem>>, vector<1x4xf32>
    %136 = arith.addf %134, %135 : vector<1x4xf32>
    %cst_88 = arith.constant 0.000000e+00 : f32
    %137 = vector.broadcast %cst_88 : f32 to vector<1x4xf32>
    %138 = arith.cmpf oge, %136, %137 : vector<1x4xf32>
    %c0_89 = arith.constant 0 : index
    %c0_90 = arith.constant 0 : index
    %139 = vector.load %arg12[%c0_89, %c0_90] : memref<1x4xf32, #tpu.memory_space<vmem>>, vector<1x4xf32>
    %140 = arith.mulf %139, %136 : vector<1x4xf32>
    %141 = arith.select %138, %136, %140 : vector<1x4xi1>, vector<1x4xf32>
    %142 = arith.truncf %141 : vector<1x4xf32> to vector<1x4xbf16>
    %c0_91 = arith.constant 0 : index
    %c0_92 = arith.constant 0 : index
    %143 = vector.load %arg13[%c0_91, %c0_92] : memref<4x4xbf16, #tpu.memory_space<vmem>>, vector<4x4xbf16>
    %cst_93 = arith.constant dense<0.000000e+00> : vector<1x4xf32>
    %144 = tpu.matmul %142, %143, %cst_93 {dimension_numbers = #tpu.dot_dimension_numbers<[1], [0], [0], [1], [0, 0, 1, 1], [], []>} : vector<1x4xbf16>, vector<4x4xbf16>, vector<1x4xf32> -> vector<1x4xf32>
    %c0_94 = arith.constant 0 : index
    %c0_95 = arith.constant 0 : index
    %145 = vector.load %arg14[%c0_94, %c0_95] : memref<1x4xf32, #tpu.memory_space<vmem>>, vector<1x4xf32>
    %146 = arith.addf %144, %145 : vector<1x4xf32>
    %147 = arith.negf %146 : vector<1x4xf32>
    %148 = math.exp %147 : vector<1x4xf32>
    %cst_96 = arith.constant 1.000000e+00 : f32
    %149 = vector.broadcast %cst_96 : f32 to vector<1x4xf32>
    %150 = arith.addf %149, %148 : vector<1x4xf32>
    %151 = arith.divf %149, %150 : vector<1x4xf32>
    %c0_97 = arith.constant 0 : index
    %c0_98 = arith.constant 0 : index
    %c0_99 = arith.constant 0 : index
    %152 = vector.load %arg15[%c0_97, %c0_98, %c0_99] : memref<1x1x4xf32, #tpu.memory_space<vmem>>, vector<1x1x4xf32>
    %153 = vector.shape_cast %152 : vector<1x1x4xf32> to vector<1x4xf32>
    %154 = vector.shape_cast %151 : vector<1x4xf32> to vector<1x1x4xf32>
    tpu.vector_store %arg15[%c0_97, %c0_98, %c0_99], %154 {strides = array<i32>} : memref<1x1x4xf32, #tpu.memory_space<vmem>>, vector<1x1x4xf32>,
    return
  }
  func.func @transform_0(%arg0: i32) -> (i32, i32, i32) {
    %c0_i32 = arith.constant 0 : i32
    %c0_i32_0 = arith.constant 0 : i32
    %c0_i32_1 = arith.constant 0 : i32
    return %arg0, %c0_i32, %c0_i32_0 : i32, i32, i32
  }
  func.func @transform_1(%arg0: i32) -> (i32, i32) {
    %c0_i32 = arith.constant 0 : i32
    %c0_i32_0 = arith.constant 0 : i32
    %c0_i32_1 = arith.constant 0 : i32
    return %c0_i32, %c0_i32_0 : i32, i32
  }
  func.func @transform_2(%arg0: i32) -> (i32, i32) {
    %c0_i32 = arith.constant 0 : i32
    %c0_i32_0 = arith.constant 0 : i32
    %c0_i32_1 = arith.constant 0 : i32
    return %c0_i32, %c0_i32_0 : i32, i32
  }
  func.func @transform_3(%arg0: i32) -> (i32, i32, i32) {
    %c0_i32 = arith.constant 0 : i32
    %c0_i32_0 = arith.constant 0 : i32
    %c0_i32_1 = arith.constant 0 : i32
    %c0_i32_2 = arith.constant 0 : i32
    return %c0_i32, %c0_i32_0, %c0_i32_1 : i32, i32, i32
  }
  func.func @transform_4(%arg0: i32) -> (i32, i32) {
    %c0_i32 = arith.constant 0 : i32
    %c0_i32_0 = arith.constant 0 : i32
    %c0_i32_1 = arith.constant 0 : i32
    return %c0_i32, %c0_i32_0 : i32, i32
  }
  func.func @transform_5(%arg0: i32) -> (i32, i32) {
    %c0_i32 = arith.constant 0 : i32
    %c0_i32_0 = arith.constant 0 : i32
    %c0_i32_1 = arith.constant 0 : i32
    return %c0_i32, %c0_i32_0 : i32, i32
  }
  func.func @transform_6(%arg0: i32) -> (i32, i32, i32) {
    %c0_i32 = arith.constant 0 : i32
    %c0_i32_0 = arith.constant 0 : i32
    %c0_i32_1 = arith.constant 0 : i32
    %c0_i32_2 = arith.constant 0 : i32
    return %c0_i32, %c0_i32_0, %c0_i32_1 : i32, i32, i32
  }
  func.func @transform_7(%arg0: i32) -> (i32, i32) {
    %c0_i32 = arith.constant 0 : i32
    %c0_i32_0 = arith.constant 0 : i32
    %c0_i32_1 = arith.constant 0 : i32
    return %c0_i32, %c0_i32_0 : i32, i32
  }
  func.func @transform_8(%arg0: i32) -> (i32, i32) {
    %c0_i32 = arith.constant 0 : i32
    %c0_i32_0 = arith.constant 0 : i32
    %c0_i32_1 = arith.constant 0 : i32
    return %c0_i32, %c0_i32_0 : i32, i32
  }
  func.func @transform_9(%arg0: i32) -> (i32, i32) {
    %c0_i32 = arith.constant 0 : i32
    %c0_i32_0 = arith.constant 0 : i32
    %c0_i32_1 = arith.constant 0 : i32
    return %c0_i32, %c0_i32_0 : i32, i32
  }
  func.func @transform_10(%arg0: i32) -> (i32, i32) {
    %c0_i32 = arith.constant 0 : i32
    %c0_i32_0 = arith.constant 0 : i32
    %c0_i32_1 = arith.constant 0 : i32
    return %c0_i32, %c0_i32_0 : i32, i32
  }
  func.func @transform_11(%arg0: i32) -> (i32, i32) {
    %c0_i32 = arith.constant 0 : i32
    %c0_i32_0 = arith.constant 0 : i32
    %c0_i32_1 = arith.constant 0 : i32
    return %c0_i32, %c0_i32_0 : i32, i32
  }
  func.func @transform_12(%arg0: i32) -> (i32, i32) {
    %c0_i32 = arith.constant 0 : i32
    %c0_i32_0 = arith.constant 0 : i32
    %c0_i32_1 = arith.constant 0 : i32
    return %c0_i32, %c0_i32_0 : i32, i32
  }
  func.func @transform_13(%arg0: i32) -> (i32, i32) {
    %c0_i32 = arith.constant 0 : i32
    %c0_i32_0 = arith.constant 0 : i32
    %c0_i32_1 = arith.constant 0 : i32
    return %c0_i32, %c0_i32_0 : i32, i32
  }
  func.func @transform_14(%arg0: i32) -> (i32, i32, i32) {
    %c0_i32 = arith.constant 0 : i32
    %c0_i32_0 = arith.constant 0 : i32
    %c0_i32_1 = arith.constant 0 : i32
    return %arg0, %c0_i32, %c0_i32_0 : i32, i32, i32
  }
}

</mosaic_0001>

<llo_original>
// kernel: tpu_custom_call.1
$region0: #{tpu_custom_call.1}
  #allocation0 [shape = 'u32[]', space=smem, size = 0x4, offset = 0x4, fixed_abs, tag = 'smem constant byte address 0x4 - core index']
  #allocation1 [shape = 'u32[144,128]{1,0:T(1,128)}', space=vmem, size = 0x12000, scoped, tag = 'internal scratch']
  %s0 = inlined_call_operand.vmem [shape: bf16[2,4,256], index: 0, kind: input, shape index: {}]
  %s1 = inlined_call_operand.vmem [shape: bf16[256,25], index: 1, kind: input, shape index: {}]
  %s2 = inlined_call_operand.vmem [shape: f32[81,25], index: 2, kind: input, shape index: {}]
  %s3 = inlined_call_operand.vmem [shape: bf16[9,4,4], index: 3, kind: input, shape index: {}]
  %s4 = inlined_call_operand.vmem [shape: f32[1,4], index: 4, kind: input, shape index: {}]
  %s5 = inlined_call_operand.vmem [shape: f32[1,4], index: 5, kind: input, shape index: {}]
  %s6 = inlined_call_operand.vmem [shape: bf16[9,4,4], index: 6, kind: input, shape index: {}]
  %s7 = inlined_call_operand.vmem [shape: f32[1,4], index: 7, kind: input, shape index: {}]
  %s8 = inlined_call_operand.vmem [shape: f32[1,4], index: 8, kind: input, shape index: {}]
  %s9 = inlined_call_operand.vmem [shape: bf16[4,4], index: 9, kind: input, shape index: {}]
  %s10 = inlined_call_operand.vmem [shape: f32[1,4], index: 10, kind: input, shape index: {}]
  %s11 = inlined_call_operand.vmem [shape: f32[1,4], index: 11, kind: input, shape index: {}]
  %s12 = inlined_call_operand.vmem [shape: bf16[4,4], index: 12, kind: input, shape index: {}]
  %s13 = inlined_call_operand.vmem [shape: f32[1,4], index: 13, kind: input, shape index: {}]
  %s14 = inlined_call_operand.hbm [shape: f32[2,1,4], index: 14, kind: output, shape index: {}]
  %s15 = sld [smem:[#allocation0]]
  $region89: #{tpu_custom_call.1} parent=0
    _
  %s17 = ssub.s32 1, %s15
  %s18 = scalar_select 0, %s17, %s15
  $region1: #{tpu_custom_call.1} parent=0
    #allocation2 [shape = 'u8[1024]{0}', space=vmem, size = 0x400, scoped, tag = 'output window, operand 0']
    #allocation3 [shape = 's32[2]{0}', space=sflag, size = 0x8, scoped, tag = 'scoped memory for tpu_custom_call.1']
    %19 = vsyncpa [#allocation3], 0
    %s20 = scalar_lea.sflag [#allocation3], 1
    %21 = vsyncpa %s20, 0
    loop: start=0, step=1, limit=4
    $region2: #{tpu_custom_call.1} parent=1 // loop_pre_header
      _
    $region3: #{tpu_custom_call.1} parent=1 // loop_header
      %s23 = sphi 0, %s27
      %p24 = scmp.ge.s32.totalorder %s23, 4
      %s33 = sphi 0, %s35
      %s36 = sphi 0, %s33
      %s37 = sphi 0, %s36
      %s53 = sphi 0, %s37
      %s57 = sphi 0, %s57
      %s59 = sphi 0, %s57
      %s60 = sphi 0, %s59
      %s74 = sphi 0, %s60
      %s78 = sphi 0, %s78
      %s80 = sphi 0, %s78
      %s81 = sphi 0, %s80
      %s95 = sphi 0, %s81
      %s99 = sphi 0, %s99
      %s101 = sphi 0, %s99
      %s102 = sphi 0, %s101
      %s116 = sphi 0, %s102
      %s120 = sphi 0, %s120
      %s122 = sphi 0, %s120
      %s123 = sphi 0, %s122
      %s137 = sphi 0, %s123
      %s141 = sphi 0, %s141
      %s143 = sphi 0, %s141
      %s144 = sphi 0, %s143
      %s158 = sphi 0, %s144
      %s162 = sphi 0, %s162
      %s164 = sphi 0, %s162
      %s165 = sphi 0, %s164
      %s179 = sphi 0, %s165
      %s183 = sphi 0, %s183
      %s185 = sphi 0, %s183
      %s186 = sphi 0, %s185
      %s200 = sphi 0, %s186
      %s204 = sphi 0, %s204
      %s206 = sphi 0, %s204
      %s207 = sphi 0, %s206
      %s221 = sphi 0, %s207
      %s225 = sphi 0, %s225
      %s227 = sphi 0, %s225
      %s228 = sphi 0, %s227
      %s242 = sphi 0, %s228
      %s246 = sphi 0, %s246
      %s248 = sphi 0, %s246
      %s249 = sphi 0, %s248
      %s263 = sphi 0, %s249
      %s267 = sphi 0, %s267
      %s269 = sphi 0, %s267
      %s270 = sphi 0, %s269
      %s284 = sphi 0, %s270
      %s288 = sphi 0, %s288
      %s290 = sphi 0, %s288
      %s291 = sphi 0, %s290
      %s305 = sphi 0, %s291
      %s309 = sphi 0, %s309
      %s311 = sphi 0, %s309
      %s312 = sphi 0, %s311
      %s326 = sphi 0, %s312
      %s332 = sphi 0, %s334
      %s335 = sphi 0, %s332
      %s336 = sphi 0, %s335
      %s352 = sphi 0, %s336
    $region4: #{tpu_custom_call.1} parent=1 // loop_header_branch
      %26 = sbr.rel (%p24) target = $region8
    $region5: #{tpu_custom_call.1} parent=1 // loop_body
      %s28 = ssub.s32 %s23, 1
      %s29 = ssub.s32 %s23, 2
      %s30 = sadd.s32 %s23, 1
      %s31 = ssub.s32 %s23, %s30
      %p32 = scmp.eq.s32.totalorder %s31, 0
      %s34 = sadd.s32 %s33, 1
      %s35 = scalar_select %p32, %s33, %s34
      %p38 = pneg %p32
      %p39 = scmp.eq.s32.totalorder %s23, 1
      %p40 = por %p38, %p39
      %p41 = scmp.ne.s32.totalorder %s33, %s36
      %p42 = scmp.eq.s32.totalorder %s23, 0
      %p43 = por %p41, %p42
      %p44 = scmp.ne.s32.totalorder %s33, %s36
      %p45 = scmp.eq.s32.totalorder %s28, 1
      %p46 = por %p44, %p45
      %p47 = scmp.ne.s32.totalorder %s36, %s37
      %p48 = scmp.eq.s32.totalorder %s28, 0
      %p49 = por %p47, %p48
      %p50 = scmp.ne.s32.totalorder %s36, %s37
      %p51 = scmp.eq.s32.totalorder %s29, 1
      %p52 = por %p50, %p51
      %p54 = scmp.ne.s32.totalorder %s37, %s53
      %p55 = scmp.eq.s32.totalorder %s29, 0
      %p56 = por %p54, %p55
      %s58 = sadd.s32 %s57, 1
      %p61 = scmp.eq.s32.totalorder %s23, 1
      %p62 = scmp.ne.s32.totalorder %s57, %s59
      %p63 = scmp.eq.s32.totalorder %s23, 0
      %p64 = por %p62, %p63
      %p65 = scmp.ne.s32.totalorder %s57, %s59
      %p66 = scmp.eq.s32.totalorder %s28, 1
      %p67 = por %p65, %p66
      %p68 = scmp.ne.s32.totalorder %s59, %s60
      %p69 = scmp.eq.s32.totalorder %s28, 0
      %p70 = por %p68, %p69
      %p71 = scmp.ne.s32.totalorder %s59, %s60
      %p72 = scmp.eq.s32.totalorder %s29, 1
      %p73 = por %p71, %p72
      %p75 = scmp.ne.s32.totalorder %s60, %s74
      %p76 = scmp.eq.s32.totalorder %s29, 0
      %p77 = por %p75, %p76
      %s79 = sadd.s32 %s78, 1
      %p82 = scmp.eq.s32.totalorder %s23, 1
      %p83 = scmp.ne.s32.totalorder %s78, %s80
      %p84 = scmp.eq.s32.totalorder %s23, 0
      %p85 = por %p83, %p84
      %p86 = scmp.ne.s32.totalorder %s78, %s80
      %p87 = scmp.eq.s32.totalorder %s28, 1
      %p88 = por %p86, %p87
      %p89 = scmp.ne.s32.totalorder %s80, %s81
      %p90 = scmp.eq.s32.totalorder %s28, 0
      %p91 = por %p89, %p90
      %p92 = scmp.ne.s32.totalorder %s80, %s81
      %p93 = scmp.eq.s32.totalorder %s29, 1
      %p94 = por %p92, %p93
      %p96 = scmp.ne.s32.totalorder %s81, %s95
      %p97 = scmp.eq.s32.totalorder %s29, 0
      %p98 = por %p96, %p97
      %s100 = sadd.s32 %s99, 1
      %p103 = scmp.eq.s32.totalorder %s23, 1
      %p104 = scmp.ne.s32.totalorder %s99, %s101
      %p105 = scmp.eq.s32.totalorder %s23, 0
      %p106 = por %p104, %p105
      %p107 = scmp.ne.s32.totalorder %s99, %s101
      %p108 = scmp.eq.s32.totalorder %s28, 1
      %p109 = por %p107, %p108
      %p110 = scmp.ne.s32.totalorder %s101, %s102
      %p111 = scmp.eq.s32.totalorder %s28, 0
      %p112 = por %p110, %p111
      %p113 = scmp.ne.s32.totalorder %s101, %s102
      %p114 = scmp.eq.s32.totalorder %s29, 1
      %p115 = por %p113, %p114
      %p117 = scmp.ne.s32.totalorder %s102, %s116
      %p118 = scmp.eq.s32.totalorder %s29, 0
      %p119 = por %p117, %p118
      %s121 = sadd.s32 %s120, 1
      %p124 = scmp.eq.s32.totalorder %s23, 1
      %p125 = scmp.ne.s32.totalorder %s120, %s122
      %p126 = scmp.eq.s32.totalorder %s23, 0
      %p127 = por %p125, %p126
      %p128 = scmp.ne.s32.totalorder %s120, %s122
      %p129 = scmp.eq.s32.totalorder %s28, 1
      %p130 = por %p128, %p129
      %p131 = scmp.ne.s32.totalorder %s122, %s123
      %p132 = scmp.eq.s32.totalorder %s28, 0
      %p133 = por %p131, %p132
      %p134 = scmp.ne.s32.totalorder %s122, %s123
      %p135 = scmp.eq.s32.totalorder %s29, 1
      %p136 = por %p134, %p135
      %p138 = scmp.ne.s32.totalorder %s123, %s137
      %p139 = scmp.eq.s32.totalorder %s29, 0
      %p140 = por %p138, %p139
      %s142 = sadd.s32 %s141, 1
      %p145 = scmp.eq.s32.totalorder %s23, 1
      %p146 = scmp.ne.s32.totalorder %s141, %s143
      %p147 = scmp.eq.s32.totalorder %s23, 0
      %p148 = por %p146, %p147
      %p149 = scmp.ne.s32.totalorder %s141, %s143
      %p150 = scmp.eq.s32.totalorder %s28, 1
      %p151 = por %p149, %p150
      %p152 = scmp.ne.s32.totalorder %s143, %s144
      %p153 = scmp.eq.s32.totalorder %s28, 0
      %p154 = por %p152, %p153
      %p155 = scmp.ne.s32.totalorder %s143, %s144
      %p156 = scmp.eq.s32.totalorder %s29, 1
      %p157 = por %p155, %p156
      %p159 = scmp.ne.s32.totalorder %s144, %s158
      %p160 = scmp.eq.s32.totalorder %s29, 0
      %p161 = por %p159, %p160
      %s163 = sadd.s32 %s162, 1
      %p166 = scmp.eq.s32.totalorder %s23, 1
      %p167 = scmp.ne.s32.totalorder %s162, %s164
      %p168 = scmp.eq.s32.totalorder %s23, 0
      %p169 = por %p167, %p168
      %p170 = scmp.ne.s32.totalorder %s162, %s164
      %p171 = scmp.eq.s32.totalorder %s28, 1
      %p172 = por %p170, %p171
      %p173 = scmp.ne.s32.totalorder %s164, %s165
      %p174 = scmp.eq.s32.totalorder %s28, 0
      %p175 = por %p173, %p174
      %p176 = scmp.ne.s32.totalorder %s164, %s165
      %p177 = scmp.eq.s32.totalorder %s29, 1
      %p178 = por %p176, %p177
      %p180 = scmp.ne.s32.totalorder %s165, %s179
      %p181 = scmp.eq.s32.totalorder %s29, 0
      %p182 = por %p180, %p181
      %s184 = sadd.s32 %s183, 1
      %p187 = scmp.eq.s32.totalorder %s23, 1
      %p188 = scmp.ne.s32.totalorder %s183, %s185
      %p189 = scmp.eq.s32.totalorder %s23, 0
      %p190 = por %p188, %p189
      %p191 = scmp.ne.s32.totalorder %s183, %s185
      %p192 = scmp.eq.s32.totalorder %s28, 1
      %p193 = por %p191, %p192
      %p194 = scmp.ne.s32.totalorder %s185, %s186
      %p195 = scmp.eq.s32.totalorder %s28, 0
      %p196 = por %p194, %p195
      %p197 = scmp.ne.s32.totalorder %s185, %s186
      %p198 = scmp.eq.s32.totalorder %s29, 1
      %p199 = por %p197, %p198
      %p201 = scmp.ne.s32.totalorder %s186, %s200
      %p202 = scmp.eq.s32.totalorder %s29, 0
      %p203 = por %p201, %p202
      %s205 = sadd.s32 %s204, 1
      %p208 = scmp.eq.s32.totalorder %s23, 1
      %p209 = scmp.ne.s32.totalorder %s204, %s206
      %p210 = scmp.eq.s32.totalorder %s23, 0
      %p211 = por %p209, %p210
      %p212 = scmp.ne.s32.totalorder %s204, %s206
      %p213 = scmp.eq.s32.totalorder %s28, 1
      %p214 = por %p212, %p213
      %p215 = scmp.ne.s32.totalorder %s206, %s207
      %p216 = scmp.eq.s32.totalorder %s28, 0
      %p217 = por %p215, %p216
      %p218 = scmp.ne.s32.totalorder %s206, %s207
      %p219 = scmp.eq.s32.totalorder %s29, 1
      %p220 = por %p218, %p219
      %p222 = scmp.ne.s32.totalorder %s207, %s221
      %p223 = scmp.eq.s32.totalorder %s29, 0
      %p224 = por %p222, %p223
      %s226 = sadd.s32 %s225, 1
      %p229 = scmp.eq.s32.totalorder %s23, 1
      %p230 = scmp.ne.s32.totalorder %s225, %s227
      %p231 = scmp.eq.s32.totalorder %s23, 0
      %p232 = por %p230, %p231
      %p233 = scmp.ne.s32.totalorder %s225, %s227
      %p234 = scmp.eq.s32.totalorder %s28, 1
      %p235 = por %p233, %p234
      %p236 = scmp.ne.s32.totalorder %s227, %s228
      %p237 = scmp.eq.s32.totalorder %s28, 0
      %p238 = por %p236, %p237
      %p239 = scmp.ne.s32.totalorder %s227, %s228
      %p240 = scmp.eq.s32.totalorder %s29, 1
      %p241 = por %p239, %p240
      %p243 = scmp.ne.s32.totalorder %s228, %s242
      %p244 = scmp.eq.s32.totalorder %s29, 0
      %p245 = por %p243, %p244
      %s247 = sadd.s32 %s246, 1
      %p250 = scmp.eq.s32.totalorder %s23, 1
      %p251 = scmp.ne.s32.totalorder %s246, %s248
      %p252 = scmp.eq.s32.totalorder %s23, 0
      %p253 = por %p251, %p252
      %p254 = scmp.ne.s32.totalorder %s246, %s248
      %p255 = scmp.eq.s32.totalorder %s28, 1
      %p256 = por %p254, %p255
      %p257 = scmp.ne.s32.totalorder %s248, %s249
      %p258 = scmp.eq.s32.totalorder %s28, 0
      %p259 = por %p257, %p258
      %p260 = scmp.ne.s32.totalorder %s248, %s249
      %p261 = scmp.eq.s32.totalorder %s29, 1
      %p262 = por %p260, %p261
      %p264 = scmp.ne.s32.totalorder %s249, %s263
      %p265 = scmp.eq.s32.totalorder %s29, 0
      %p266 = por %p264, %p265
      %s268 = sadd.s32 %s267, 1
      %p271 = scmp.eq.s32.totalorder %s23, 1
      %p272 = scmp.ne.s32.totalorder %s267, %s269
      %p273 = scmp.eq.s32.totalorder %s23, 0
      %p274 = por %p272, %p273
      %p275 = scmp.ne.s32.totalorder %s267, %s269
      %p276 = scmp.eq.s32.totalorder %s28, 1
      %p277 = por %p275, %p276
      %p278 = scmp.ne.s32.totalorder %s269, %s270
      %p279 = scmp.eq.s32.totalorder %s28, 0
      %p280 = por %p278, %p279
      %p281 = scmp.ne.s32.totalorder %s269, %s270
      %p282 = scmp.eq.s32.totalorder %s29, 1
      %p283 = por %p281, %p282
      %p285 = scmp.ne.s32.totalorder %s270, %s284
      %p286 = scmp.eq.s32.totalorder %s29, 0
      %p287 = por %p285, %p286
      %s289 = sadd.s32 %s288, 1
      %p292 = scmp.eq.s32.totalorder %s23, 1
      %p293 = scmp.ne.s32.totalorder %s288, %s290
      %p294 = scmp.eq.s32.totalorder %s23, 0
      %p295 = por %p293, %p294
      %p296 = scmp.ne.s32.totalorder %s288, %s290
      %p297 = scmp.eq.s32.totalorder %s28, 1
      %p298 = por %p296, %p297
      %p299 = scmp.ne.s32.totalorder %s290, %s291
      %p300 = scmp.eq.s32.totalorder %s28, 0
      %p301 = por %p299, %p300
      %p302 = scmp.ne.s32.totalorder %s290, %s291
      %p303 = scmp.eq.s32.totalorder %s29, 1
      %p304 = por %p302, %p303
      %p306 = scmp.ne.s32.totalorder %s291, %s305
      %p307 = scmp.eq.s32.totalorder %s29, 0
      %p308 = por %p306, %p307
      %s310 = sadd.s32 %s309, 1
      %p313 = scmp.eq.s32.totalorder %s23, 1
      %p314 = scmp.ne.s32.totalorder %s309, %s311
      %p315 = scmp.eq.s32.totalorder %s23, 0
      %p316 = por %p314, %p315
      %p317 = scmp.ne.s32.totalorder %s309, %s311
      %p318 = scmp.eq.s32.totalorder %s28, 1
      %p319 = por %p317, %p318
      %p320 = scmp.ne.s32.totalorder %s311, %s312
      %p321 = scmp.eq.s32.totalorder %s28, 0
      %p322 = por %p320, %p321
      %p323 = scmp.ne.s32.totalorder %s311, %s312
      %p324 = scmp.eq.s32.totalorder %s29, 1
      %p325 = por %p323, %p324
      %p327 = scmp.ne.s32.totalorder %s312, %s326
      %p328 = scmp.eq.s32.totalorder %s29, 0
      %p329 = por %p327, %p328
      %s330 = ssub.s32 %s23, %s30
      %p331 = scmp.eq.s32.totalorder %s330, 0
      %s333 = sadd.s32 %s332, 1
      %s334 = scalar_select %p331, %s332, %s333
      %p337 = pneg %p331
      %p338 = scmp.eq.s32.totalorder %s23, 1
      %p339 = por %p337, %p338
      %p340 = scmp.ne.s32.totalorder %s332, %s335
      %p341 = scmp.eq.s32.totalorder %s23, 0
      %p342 = por %p340, %p341
      %p343 = scmp.ne.s32.totalorder %s332, %s335
      %p344 = scmp.eq.s32.totalorder %s28, 1
      %p345 = por %p343, %p344
      %p346 = scmp.ne.s32.totalorder %s335, %s336
      %p347 = scmp.eq.s32.totalorder %s28, 0
      %p348 = por %p346, %p347
      %p349 = scmp.ne.s32.totalorder %s335, %s336
      %p350 = scmp.eq.s32.totalorder %s29, 1
      %p351 = por %p349, %p350
      %p353 = scmp.ne.s32.totalorder %s336, %s352
      %p354 = scmp.eq.s32.totalorder %s29, 0
      %p355 = por %p353, %p354
      %p356 = scmp.le.s32.totalorder 1, %s23
      %p357 = scmp.lt.s32.totalorder %s23, 3
      %p358 = pnand %p356, %p357
      %p359 = pneg %p358
      // Predicated region
      $region9: #{tpu_custom_call.1} parent=5 // pred_check
        _
      $region10: #{tpu_custom_call.1} parent=5 // pred_check_branch
        %361 = sbr.rel (%p358) target = $region12
      $region11: #{tpu_custom_call.1} parent=5 // pred_region
        %s362 = ssub.s32 %s23, 1
        // Predicated region
        $region13: #{tpu_custom_call.1} parent=11 // pred_check
          %p363 = pneg %p70
        $region14: #{tpu_custom_call.1} parent=11 // pred_check_branch
          %365 = sbr.rel (%p363) target = $region16
        $region15: #{tpu_custom_call.1} parent=11 // pred_region
          _
        $region16: #{tpu_custom_call.1} parent=11 // pred_fallthru
          _
        // Predicated region
        $region17: #{tpu_custom_call.1} parent=11 // pred_check
          %p366 = pneg %p91
        $region18: #{tpu_custom_call.1} parent=11 // pred_check_branch
          %368 = sbr.rel (%p366) target = $region20
        $region19: #{tpu_custom_call.1} parent=11 // pred_region
          _
        $region20: #{tpu_custom_call.1} parent=11 // pred_fallthru
          _
        // Predicated region
        $region21: #{tpu_custom_call.1} parent=11 // pred_check
          %p369 = pneg %p112
        $region22: #{tpu_custom_call.1} parent=11 // pred_check_branch
          %371 = sbr.rel (%p369) target = $region24
        $region23: #{tpu_custom_call.1} parent=11 // pred_region
          _
        $region24: #{tpu_custom_call.1} parent=11 // pred_fallthru
          _
        // Predicated region
        $region25: #{tpu_custom_call.1} parent=11 // pred_check
          %p372 = pneg %p133
        $region26: #{tpu_custom_call.1} parent=11 // pred_check_branch
          %374 = sbr.rel (%p372) target = $region28
        $region27: #{tpu_custom_call.1} parent=11 // pred_region
          _
        $region28: #{tpu_custom_call.1} parent=11 // pred_fallthru
          _
        // Predicated region
        $region29: #{tpu_custom_call.1} parent=11 // pred_check
          %p375 = pneg %p154
        $region30: #{tpu_custom_call.1} parent=11 // pred_check_branch
          %377 = sbr.rel (%p375) target = $region32
        $region31: #{tpu_custom_call.1} parent=11 // pred_region
          _
        $region32: #{tpu_custom_call.1} parent=11 // pred_fallthru
          _
        // Predicated region
        $region33: #{tpu_custom_call.1} parent=11 // pred_check
          %p378 = pneg %p175
        $region34: #{tpu_custom_call.1} parent=11 // pred_check_branch
          %380 = sbr.rel (%p378) target = $region36
        $region35: #{tpu_custom_call.1} parent=11 // pred_region
          _
        $region36: #{tpu_custom_call.1} parent=11 // pred_fallthru
          _
        // Predicated region
        $region37: #{tpu_custom_call.1} parent=11 // pred_check
          %p381 = pneg %p196
        $region38: #{tpu_custom_call.1} parent=11 // pred_check_branch
          %383 = sbr.rel (%p381) target = $region40
        $region39: #{tpu_custom_call.1} parent=11 // pred_region
          _
        $region40: #{tpu_custom_call.1} parent=11 // pred_fallthru
          _
        // Predicated region
        $region41: #{tpu_custom_call.1} parent=11 // pred_check
          %p384 = pneg %p217
        $region42: #{tpu_custom_call.1} parent=11 // pred_check_branch
          %386 = sbr.rel (%p384) target = $region44
        $region43: #{tpu_custom_call.1} parent=11 // pred_region
          _
        $region44: #{tpu_custom_call.1} parent=11 // pred_fallthru
          _
        // Predicated region
        $region45: #{tpu_custom_call.1} parent=11 // pred_check
          %p387 = pneg %p238
        $region46: #{tpu_custom_call.1} parent=11 // pred_check_branch
          %389 = sbr.rel (%p387) target = $region48
        $region47: #{tpu_custom_call.1} parent=11 // pred_region
          _
        $region48: #{tpu_custom_call.1} parent=11 // pred_fallthru
          _
        // Predicated region
        $region49: #{tpu_custom_call.1} parent=11 // pred_check
          %p390 = pneg %p259
        $region50: #{tpu_custom_call.1} parent=11 // pred_check_branch
          %392 = sbr.rel (%p390) target = $region52
        $region51: #{tpu_custom_call.1} parent=11 // pred_region
          _
        $region52: #{tpu_custom_call.1} parent=11 // pred_fallthru
          _
        // Predicated region
        $region53: #{tpu_custom_call.1} parent=11 // pred_check
          %p393 = pneg %p280
        $region54: #{tpu_custom_call.1} parent=11 // pred_check_branch
          %395 = sbr.rel (%p393) target = $region56
        $region55: #{tpu_custom_call.1} parent=11 // pred_region
          _
        $region56: #{tpu_custom_call.1} parent=11 // pred_fallthru
          _
        // Predicated region
        $region57: #{tpu_custom_call.1} parent=11 // pred_check
          %p396 = pneg %p301
        $region58: #{tpu_custom_call.1} parent=11 // pred_check_branch
          %398 = sbr.rel (%p396) target = $region60
        $region59: #{tpu_custom_call.1} parent=11 // pred_region
          _
        $region60: #{tpu_custom_call.1} parent=11 // pred_fallthru
          _
        // Predicated region
        $region61: #{tpu_custom_call.1} parent=11 // pred_check
          %p399 = pneg %p322
        $region62: #{tpu_custom_call.1} parent=11 // pred_check_branch
          %401 = sbr.rel (%p399) target = $region64
        $region63: #{tpu_custom_call.1} parent=11 // pred_region
          _
        $region64: #{tpu_custom_call.1} parent=11 // pred_fallthru
          _
      $region12: #{tpu_custom_call.1} parent=5 // pred_fallthru
        _
      %p402 = scmp.lt.s32.totalorder %s23, 2
      // Predicated region
      $region65: #{tpu_custom_call.1} parent=5 // pred_check
        %p403 = pneg %p402
      $region66: #{tpu_custom_call.1} parent=5 // pred_check_branch
        %405 = sbr.rel (%p403) target = $region68
      $region67: #{tpu_custom_call.1} parent=5 // pred_region
        // Predicated region
        $region69: #{tpu_custom_call.1} parent=67 // pred_check
          %p406 = pneg %p43
        $region70: #{tpu_custom_call.1} parent=67 // pred_check_branch
          %408 = sbr.rel (%p406) target = $region72
        $region71: #{tpu_custom_call.1} parent=67 // pred_region
          %p409 = scmp.lt.s32.totalorder %s23, 1
          %s410 = scalar_select %p409, %s23, 1
          %s411 = smul.addr %s410, 2
          %s412 = smul.addr %s411, 2
          %s413 = scalar_lea.vmem %s0, %s412
        $region72: #{tpu_custom_call.1} parent=67 // pred_fallthru
          _
      $region68: #{tpu_custom_call.1} parent=5 // pred_fallthru
        _
      %p414 = scmp.le.s32.totalorder 1, %s23
      %p415 = scmp.lt.s32.totalorder %s23, 3
      %p416 = pnand %p414, %p415
      %p417 = pneg %p416
      // Predicated region
      $region73: #{tpu_custom_call.1} parent=5 // pred_check
        _
      $region74: #{tpu_custom_call.1} parent=5 // pred_check_branch
        %419 = sbr.rel (%p416) target = $region76
      $region75: #{tpu_custom_call.1} parent=5 // pred_region
        %s420 = ssub.s32 %s23, 1
        %p421 = scmp.lt.s32.totalorder %s28, 1
        %s422 = scalar_select %p421, %s28, 1
        %s423 = smul.addr %s422, 2
        %s424 = smul.addr %s423, 2
        %s425 = scalar_lea.vmem %s0, %s424
        %p426 = pneg %p49
        %p427 = pneg %p46
        %p428 = pneg %p70
        %p429 = pneg %p67
        %p430 = pneg %p91
        %p431 = pneg %p88
        %p432 = pneg %p112
        %p433 = pneg %p109
        %p434 = pneg %p133
        %p435 = pneg %p130
        %p436 = pneg %p154
        %p437 = pneg %p151
        %p438 = pneg %p175
        %p439 = pneg %p172
        %p440 = pneg %p196
        %p441 = pneg %p193
        %p442 = pneg %p217
        %p443 = pneg %p214
        %p444 = pneg %p238
        %p445 = pneg %p235
        %p446 = pneg %p259
        %p447 = pneg %p256
        %p448 = pneg %p280
        %p449 = pneg %p277
        %p450 = pneg %p301
        %p451 = pneg %p298
        %p452 = pneg %p322
        %p453 = pneg %p319
        %p454 = pneg %p348
        %p455 = pneg %p345
        %s456 = sand.u32 %s335, 1
        %s457 = scalar_lea.sflag [#allocation3], %s456
        %s458 = sand.u32 %s335, 1
        %s459 = scalar_lea.vmem [#allocation2], %s458
        %p460 = scmp.lt.s32.totalorder %s28, 1
        %s461 = scalar_select %p460, %s28, 1
        %s462 = smul.addr %s461, 2
        %s463 = smul.addr %s462, 2
        %s464 = scalar_lea.vmem %s0, %s463
        %v466 = vld [vmem:[%s1] sm:$0xf]
        %v467 = vld [vmem:[%s1 + $0x4] sm:$0xf]
        %v468 = vld [vmem:[%s1 + $0x8] sm:$0xf]
        %v469 = vld [vmem:[%s1 + $0xc] sm:$0xf]
        %v470 = vld [vmem:[%s1 + $0x10] sm:$0xf]
        %v471 = vld [vmem:[%s1 + $0x14] sm:$0xf]
        %v472 = vld [vmem:[%s1 + $0x18] sm:$0xf]
        %v473 = vld [vmem:[%s1 + $0x1c] sm:$0xf]
        %v474 = vld [vmem:[%s1 + $0x20] sm:$0xf]
        %v475 = vld [vmem:[%s1 + $0x24] sm:$0xf]
        %v476 = vld [vmem:[%s1 + $0x28] sm:$0xf]
        %v477 = vld [vmem:[%s1 + $0x2c] sm:$0xf]
        %v478 = vld [vmem:[%s1 + $0x30] sm:$0xf]
        %v479 = vld [vmem:[%s1 + $0x34] sm:$0xf]
        %v480 = vld [vmem:[%s1 + $0x38] sm:$0xf]
        %v481 = vld [vmem:[%s1 + $0x3c] sm:$0xf]
        %v482 = vld [vmem:[%s1 + $0x40] sm:$0xf]
        %v483 = vld [vmem:[%s1 + $0x44] sm:$0xf]
        %v484 = vld [vmem:[%s1 + $0x48] sm:$0xf]
        %v485 = vld [vmem:[%s1 + $0x4c] sm:$0xf]
        %v486 = vld [vmem:[%s1 + $0x50] sm:$0xf]
        %v487 = vld [vmem:[%s1 + $0x54] sm:$0xf]
        %v488 = vld [vmem:[%s1 + $0x58] sm:$0xf]
        %v489 = vld [vmem:[%s1 + $0x5c] sm:$0xf]
        %v490 = vld [vmem:[%s1 + $0x60] sm:$0xf]
        %v491 = vld [vmem:[%s1 + $0x64] sm:$0xf]
        %v492 = vld [vmem:[%s1 + $0x68] sm:$0xf]
        %v493 = vld [vmem:[%s1 + $0x6c] sm:$0xf]
        %v494 = vld [vmem:[%s1 + $0x70] sm:$0xf]
        %v495 = vld [vmem:[%s1 + $0x74] sm:$0xf]
        %v496 = vld [vmem:[%s1 + $0x78] sm:$0xf]
        %v497 = vld [vmem:[%s1 + $0x7c] sm:$0xf]
        %v498 = vld [vmem:[%s2] sm:$0xff]
        %v499 = vld [vmem:[%s2 + $0x8] sm:$0xff]
        %v500 = vld [vmem:[%s2 + $0x10] sm:$0xff]
        %v501 = vld [vmem:[%s2 + $0x18] sm:$0xff]
        %v502 = vld [vmem:[%s2 + $0x20] sm:$0xff]
        %v503 = vld [vmem:[%s2 + $0x28] sm:$0xff]
        %v504 = vld [vmem:[%s2 + $0x30] sm:$0xff]
        %v505 = vld [vmem:[%s2 + $0x38] sm:$0xff]
        %v506 = vld [vmem:[%s2 + $0x40] sm:$0xff]
        %v507 = vld [vmem:[%s2 + $0x48] sm:$0xff]
        %v508 = vld [vmem:[%s2 + $0x50] sm:$0x1]
        %v509 = vld [vmem:[%s464] sm:$0xf]
        %v512 = vunpack.c.l.s4 1983009808
        %v513 = vunpack.c.0.s8 %v512
        %v514 = vlaneseq
        %v515 = vshrl.u32 %v514, 7
        %v516 = vsub.s32 %v513, %v515
        %v517 = vrot.slane %v509, %v516
        %v518 = vcombine.high %v517, %v517
        %v553 = vunpack.c.l.b16 %v466
        %v554 = vunpack.c.l.b16 %v467
        %v555 = vunpack.c.l.b16 %v468
        %v556 = vunpack.c.l.b16 %v469
        %v557 = vunpack.c.l.b16 %v470
        %v558 = vunpack.c.l.b16 %v471
        %v559 = vunpack.c.l.b16 %v472
        %v560 = vunpack.c.l.b16 %v473
        %v561 = vunpack.c.l.b16 %v474
        %v562 = vunpack.c.l.b16 %v475
        %v563 = vunpack.c.l.b16 %v476
        %v564 = vunpack.c.l.b16 %v477
        %v565 = vunpack.c.l.b16 %v478
        %v566 = vunpack.c.l.b16 %v479
        %v567 = vunpack.c.l.b16 %v480
        %v568 = vunpack.c.l.b16 %v481
        %v569 = vunpack.c.l.b16 %v482
        %v570 = vunpack.c.l.b16 %v483
        %v571 = vunpack.c.l.b16 %v484
        %v572 = vunpack.c.l.b16 %v485
        %v573 = vunpack.c.l.b16 %v486
        %v574 = vunpack.c.l.b16 %v487
        %v575 = vunpack.c.l.b16 %v488
        %v576 = vunpack.c.l.b16 %v489
        %v577 = vunpack.c.l.b16 %v490
        %v578 = vunpack.c.l.b16 %v491
        %v579 = vunpack.c.l.b16 %v492
        %v580 = vunpack.c.l.b16 %v493
        %v581 = vunpack.c.l.b16 %v494
        %v582 = vunpack.c.l.b16 %v495
        %v583 = vunpack.c.l.b16 %v496
        %v584 = vunpack.c.l.b16 %v497
        %v585 = vpack.c.b16 %v554, %v553
        %v586 = vpack.c.b16 %v556, %v555
        %v587 = vpack.c.b16 %v558, %v557
        %v588 = vpack.c.b16 %v560, %v559
        %v589 = vpack.c.b16 %v562, %v561
        %v590 = vpack.c.b16 %v564, %v563
        %v591 = vpack.c.b16 %v566, %v565
        %v592 = vpack.c.b16 %v568, %v567
        %v593 = vpack.c.b16 %v570, %v569
        %v594 = vpack.c.b16 %v572, %v571
        %v595 = vpack.c.b16 %v574, %v573
        %v596 = vpack.c.b16 %v576, %v575
        %v597 = vpack.c.b16 %v578, %v577
        %v598 = vpack.c.b16 %v580, %v579
        %v599 = vpack.c.b16 %v582, %v581
        %v600 = vpack.c.b16 %v584, %v583
        %617 = vmatprep.subr.bf16.mxu0 0
        %618 = vmatpush1.bf16.msra.mxu0 %v585
        %619 = vmatprep.subr.bf16.mxu0 0
        %620 = vmatpush1.bf16.msra.mxu0 %v586
        %621 = vmatprep.subr.bf16.mxu0 0
        %622 = vmatpush1.bf16.msra.mxu0 %v587
        %623 = vmatprep.subr.bf16.mxu0 0
        %624 = vmatpush1.bf16.msra.mxu0 %v588
        %625 = vmatprep.subr.bf16.mxu0 0
        %626 = vmatpush1.bf16.msra.mxu0 %v589
        %627 = vmatprep.subr.bf16.mxu0 0
        %628 = vmatpush1.bf16.msra.mxu0 %v590
        %629 = vmatprep.subr.bf16.mxu0 0
        %630 = vmatpush1.bf16.msra.mxu0 %v591
        %631 = vmatprep.subr.bf16.mxu0 0
        %632 = vmatpush1.bf16.msra.mxu0 %v592
        %633 = vmatprep.subr.bf16.mxu0 0
        %634 = vmatpush1.bf16.msra.mxu0 %v593
        %635 = vmatprep.subr.bf16.mxu0 0
        %636 = vmatpush1.bf16.msra.mxu0 %v594
        %637 = vmatprep.subr.bf16.mxu0 0
        %638 = vmatpush1.bf16.msra.mxu0 %v595
        %639 = vmatprep.subr.bf16.mxu0 0
        %640 = vmatpush1.bf16.msra.mxu0 %v596
        %641 = vmatprep.subr.bf16.mxu0 0
        %642 = vmatpush1.bf16.msra.mxu0 %v597
        %643 = vmatprep.subr.bf16.mxu0 0
        %644 = vmatpush1.bf16.msra.mxu0 %v598
        %645 = vmatprep.subr.bf16.mxu0 0
        %646 = vmatpush1.bf16.msra.mxu0 %v599
        %647 = vmatprep.subr.bf16.mxu0 0
        %648 = vmatpush1.bf16.msra.mxu0 %v600
        %649 = vmatprep.mubr.bf16.mxu0 %v518
        %650 = vmatmul.mubr.bf16.gmra.mrb[0].mxu0 %v517
        %v651 = vpop.f32.mrb[0].mxu0
        %v652 = vadd.f32 0.0, %v651
        %v653 = vpop.f32.mrb[0].mxu0
        %v654 = vpop.f32.mrb[0].mxu0
        %v655 = vpop.f32.mrb[0].mxu0
        %656 = vdwg.mxu0
        %vm657 = vcmask 203776
        %v659 = vsel %vm657, %v498, 0
        %v662 = vsel %vm657, %v499, 0
        %v665 = vsel %vm657, %v500, 0
        %v668 = vsel %vm657, %v501, 0
        %v671 = vsel %vm657, %v502, 0
        %v674 = vsel %vm657, %v503, 0
        %v677 = vsel %vm657, %v504, 0
        %v680 = vsel %vm657, %v505, 0
        %v683 = vsel %vm657, %v506, 0
        %v686 = vsel %vm657, %v507, 0
        %v689 = vsel %vm657, %v508, 0
        %v692 = vsel %vm657, %v652, 0
        %694 = vmatprep.subr.mxu0 0.0
        %695 = vmatpush1.xpose.msra.mxu0 %v692
        %696 = vmatprep.subr.mxu0 0.0
        %697 = vmatpush1.xpose.msra.mxu0 0.0
        %698 = vmatprep.subr.mxu0 0.0
        %699 = vmatpush1.xpose.msra.mxu0 0.0
        %700 = vmatprep.subr.mxu0 0.0
        %701 = vmatpush1.xpose.msra.mxu0 0.0
        %702 = vmatprep.subr.mxu0 0.0
        %703 = vmatpush1.xpose.msra.mxu0 0.0
        %704 = vmatprep.subr.mxu0 0.0
        %705 = vmatpush1.xpose.msra.mxu0 0.0
        %706 = vmatprep.subr.mxu0 0.0
        %707 = vmatpush1.xpose.msra.mxu0 0.0
        %708 = vmatprep.subr.mxu0 0.0
        %709 = vmatpush1.xpose.msra.mxu0 0.0
        %710 = vmatprep.subr.mxu0 0.0
        %711 = vmatpush1.xpose.msra.mxu0 0.0
        %712 = vmatprep.subr.mxu0 0.0
        %713 = vmatpush1.xpose.msra.mxu0 0.0
        %714 = vmatprep.subr.mxu0 0.0
        %715 = vmatpush1.xpose.msra.mxu0 0.0
        %716 = vmatprep.subr.mxu0 0.0
        %717 = vmatpush1.xpose.msra.mxu0 0.0
        %718 = vmatprep.subr.mxu0 0.0
        %719 = vmatpush1.xpose.msra.mxu0 0.0
        %720 = vmatprep.subr.mxu0 0.0
        %721 = vmatpush1.xpose.msra.mxu0 0.0
        %722 = vmatprep.subr.mxu0 0.0
        %723 = vmatpush1.xpose.msra.mxu0 0.0
        %724 = vmatprep.subr.mxu0 0.0
        %725 = vmatpush1.xpose.msra.mxu0 0.0
        %726 = vmatprep.subr.mxu0 0.0
        %727 = vmatpush1.xpose.msra.mxu0 0.0
        %728 = vmatprep.subr.mxu0 0.0
        %729 = vmatpush1.xpose.msra.mxu0 0.0
        %730 = vmatprep.subr.mxu0 0.0
        %731 = vmatpush1.xpose.msra.mxu0 0.0
        %732 = vmatprep.subr.mxu0 0.0
        %733 = vmatpush1.xpose.msra.mxu0 0.0
        %734 = vmatprep.subr.mxu0 0.0
        %735 = vmatpush1.xpose.msra.mxu0 0.0
        %736 = vmatprep.subr.mxu0 0.0
        %737 = vmatpush1.xpose.msra.mxu0 0.0
        %738 = vmatprep.subr.mxu0 0.0
        %739 = vmatpush1.xpose.msra.mxu0 0.0
        %740 = vmatprep.subr.mxu0 0.0
        %741 = vmatpush1.xpose.msra.mxu0 0.0
        %742 = vmatprep.subr.mxu0 0.0
        %743 = vmatpush1.xpose.msra.mxu0 0.0
        %744 = vmatprep.subr.mxu0 0.0
        %745 = vmatpush1.xpose.msra.mxu0 0.0
        %746 = vmatprep.subr.mxu0 0.0
        %747 = vmatpush1.xpose.msra.mxu0 0.0
        %748 = vmatprep.subr.mxu0 0.0
        %749 = vmatpush1.xpose.msra.mxu0 0.0
        %750 = vmatprep.subr.mxu0 0.0
        %751 = vmatpush1.xpose.msra.mxu0 0.0
        %752 = vmatprep.subr.mxu0 0.0
        %753 = vmatpush1.xpose.msra.mxu0 0.0
        %754 = vmatprep.subr.mxu0 0.0
        %755 = vmatpush1.xpose.msra.mxu0 0.0
        %756 = vmatprep.subr.mxu0 0.0
        %757 = vmatpush1.xpose.msra.mxu0 0.0
        %758 = vmatprep.mubr.f32.mxu0 0.0
        %759 = vmatmul.mubr.f32.gmra.mrb[0].mxu0 %v659
        %v760 = vpop.f32.mrb[0].mxu0
        %v761 = vadd.f32 0.0, %v760
        %v762 = vpop.f32.mrb[0].mxu0
        %763 = vmatprep.mubr.f32.mxu0 0.0
        %764 = vmatmul.mubr.f32.gmra.mrb[0].mxu0 %v662
        %v765 = vpop.f32.mrb[0].mxu0
        %v766 = vadd.f32 0.0, %v765
        %v767 = vpop.f32.mrb[0].mxu0
        %768 = vmatprep.mubr.f32.mxu0 0.0
        %769 = vmatmul.mubr.f32.gmra.mrb[0].mxu0 %v665
        %v770 = vpop.f32.mrb[0].mxu0
        %v771 = vadd.f32 0.0, %v770
        %v772 = vpop.f32.mrb[0].mxu0
        %773 = vmatprep.mubr.f32.mxu0 0.0
        %774 = vmatmul.mubr.f32.gmra.mrb[0].mxu0 %v668
        %v775 = vpop.f32.mrb[0].mxu0
        %v776 = vadd.f32 0.0, %v775
        %v777 = vpop.f32.mrb[0].mxu0
        %778 = vmatprep.mubr.f32.mxu0 0.0
        %779 = vmatmul.mubr.f32.gmra.mrb[0].mxu0 %v671
        %v780 = vpop.f32.mrb[0].mxu0
        %v781 = vadd.f32 0.0, %v780
        %v782 = vpop.f32.mrb[0].mxu0
        %783 = vmatprep.mubr.f32.mxu0 0.0
        %784 = vmatmul.mubr.f32.gmra.mrb[0].mxu0 %v674
        %v785 = vpop.f32.mrb[0].mxu0
        %v786 = vadd.f32 0.0, %v785
        %v787 = vpop.f32.mrb[0].mxu0
        %788 = vmatprep.mubr.f32.mxu0 0.0
        %789 = vmatmul.mubr.f32.gmra.mrb[0].mxu0 %v677
        %v790 = vpop.f32.mrb[0].mxu0
        %v791 = vadd.f32 0.0, %v790
        %v792 = vpop.f32.mrb[0].mxu0
        %793 = vmatprep.mubr.f32.mxu0 0.0
        %794 = vmatmul.mubr.f32.gmra.mrb[0].mxu0 %v680
        %v795 = vpop.f32.mrb[0].mxu0
        %v796 = vadd.f32 0.0, %v795
        %v797 = vpop.f32.mrb[0].mxu0
        %798 = vmatprep.mubr.f32.mxu0 0.0
        %799 = vmatmul.mubr.f32.gmra.mrb[0].mxu0 %v683
        %v800 = vpop.f32.mrb[0].mxu0
        %v801 = vadd.f32 0.0, %v800
        %v802 = vpop.f32.mrb[0].mxu0
        %803 = vmatprep.mubr.f32.mxu0 0.0
        %804 = vmatmul.mubr.f32.gmra.mrb[0].mxu0 %v686
        %v805 = vpop.f32.mrb[0].mxu0
        %v806 = vadd.f32 0.0, %v805
        %v807 = vpop.f32.mrb[0].mxu0
        %808 = vmatprep.mubr.f32.mxu0 0.0
        %809 = vmatmul.mubr.f32.gmra.mrb[0].mxu0 %v689
        %v810 = vpop.f32.mrb[0].mxu0
        %v811 = vadd.f32 0.0, %v810
        %v812 = vpop.f32.mrb[0].mxu0
        %813 = vdwg.mxu0
        %v814 = vpack.c.bf16 %v766, %v761
        %v815 = vld [vmem:[%s3] sm:$0x3]
        %v816 = vpack.c.bf16 %v771, %v766
        %s817 = scalar_lea.vmem %s3, 2
        %v818 = vld [vmem:[%s817] sm:$0x3]
        %v820 = vshrl.u32 %v816, 16
        %v822 = vshll.u32 %v816, 16
        %v824 = vrot.slane %v822, 1
        %v825 = vor.u32 %v820, %v824
        %vm826 = vcmask 31744
        %v828 = vsel %vm826, %v825, 0
        %vm830 = vcmask 1041408
        %v832 = vsel %vm830, %v818, 0
        %834 = vmatprep.subr.bf16.mxu0 0
        %835 = vmatpush1.bf16.msra.mxu0 %v832
        %836 = vmatprep.subr.bf16.mxu0 0
        %837 = vmatpush1.bf16.msra.mxu0 0
        %838 = vmatprep.subr.bf16.mxu0 0
        %839 = vmatpush1.bf16.msra.mxu0 0
        %840 = vmatprep.subr.bf16.mxu0 0
        %841 = vmatpush1.bf16.msra.mxu0 0
        %842 = vmatprep.subr.bf16.mxu0 0
        %843 = vmatpush1.bf16.msra.mxu0 0
        %844 = vmatprep.subr.bf16.mxu0 0
        %845 = vmatpush1.bf16.msra.mxu0 0
        %846 = vmatprep.subr.bf16.mxu0 0
        %847 = vmatpush1.bf16.msra.mxu0 0
        %848 = vmatprep.subr.bf16.mxu0 0
        %849 = vmatpush1.bf16.msra.mxu0 0
        %850 = vmatprep.subr.bf16.mxu0 0
        %851 = vmatpush1.bf16.msra.mxu0 0
        %852 = vmatprep.subr.bf16.mxu0 0
        %853 = vmatpush1.bf16.msra.mxu0 0
        %854 = vmatprep.subr.bf16.mxu0 0
        %855 = vmatpush1.bf16.msra.mxu0 0
        %856 = vmatprep.subr.bf16.mxu0 0
        %857 = vmatpush1.bf16.msra.mxu0 0
        %858 = vmatprep.subr.bf16.mxu0 0
        %859 = vmatpush1.bf16.msra.mxu0 0
        %860 = vmatprep.subr.bf16.mxu0 0
        %861 = vmatpush1.bf16.msra.mxu0 0
        %862 = vmatprep.subr.bf16.mxu0 0
        %863 = vmatpush1.bf16.msra.mxu0 0
        %864 = vmatprep.subr.bf16.mxu0 0
        %865 = vmatpush1.bf16.msra.mxu0 0
        %866 = vmatprep.mubr.bf16.mxu0 0
        %867 = vmatmul.mubr.bf16.gmra.mrb[0].mxu0 %v828
        %v868 = vpop.f32.mrb[0].mxu0
        %v869 = vadd.f32 0.0, %v868
        %v870 = vpop.f32.mrb[0].mxu0
        %v871 = vpop.f32.mrb[0].mxu0
        %v872 = vadd.f32 0.0, %v871
        %v873 = vpop.f32.mrb[0].mxu0
        %874 = vdwg.mxu0
        %v876 = vsel %vm826, %v814, 0
        %v879 = vsel %vm830, %v815, 0
        %881 = vmatprep.subr.bf16.mxu0 0
        %882 = vmatpush1.bf16.msra.mxu0 %v879
        %883 = vmatprep.subr.bf16.mxu0 0
        %884 = vmatpush1.bf16.msra.mxu0 0
        %885 = vmatprep.subr.bf16.mxu0 0
        %886 = vmatpush1.bf16.msra.mxu0 0
        %887 = vmatprep.subr.bf16.mxu0 0
        %888 = vmatpush1.bf16.msra.mxu0 0
        %889 = vmatprep.subr.bf16.mxu0 0
        %890 = vmatpush1.bf16.msra.mxu0 0
        %891 = vmatprep.subr.bf16.mxu0 0
        %892 = vmatpush1.bf16.msra.mxu0 0
        %893 = vmatprep.subr.bf16.mxu0 0
        %894 = vmatpush1.bf16.msra.mxu0 0
        %895 = vmatprep.subr.bf16.mxu0 0
        %896 = vmatpush1.bf16.msra.mxu0 0
        %897 = vmatprep.subr.bf16.mxu0 0
        %898 = vmatpush1.bf16.msra.mxu0 0
        %899 = vmatprep.subr.bf16.mxu0 0
        %900 = vmatpush1.bf16.msra.mxu0 0
        %901 = vmatprep.subr.bf16.mxu0 0
        %902 = vmatpush1.bf16.msra.mxu0 0
        %903 = vmatprep.subr.bf16.mxu0 0
        %904 = vmatpush1.bf16.msra.mxu0 0
        %905 = vmatprep.subr.bf16.mxu0 0
        %906 = vmatpush1.bf16.msra.mxu0 0
        %907 = vmatprep.subr.bf16.mxu0 0
        %908 = vmatpush1.bf16.msra.mxu0 0
        %909 = vmatprep.subr.bf16.mxu0 0
        %910 = vmatpush1.bf16.msra.mxu0 0
        %911 = vmatprep.subr.bf16.mxu0 0
        %912 = vmatpush1.bf16.msra.mxu0 0
        %913 = vmatprep.mubr.bf16.mxu0 0
        %914 = vmatmul.mubr.bf16.gmra.mrb[0].mxu0 %v876
        %v915 = vpop.f32.mrb[0].mxu0
        %v916 = vadd.f32 %v869, %v915
        %v917 = vpop.f32.mrb[0].mxu0
        %v918 = vpop.f32.mrb[0].mxu0
        %v919 = vadd.f32 %v872, %v918
        %v920 = vpop.f32.mrb[0].mxu0
        %921 = vdwg.mxu0
        %v922 = vpack.c.bf16 %v776, %v771
        %s923 = scalar_lea.vmem %s3, 4
        %v924 = vld [vmem:[%s923] sm:$0x3]
        %v926 = vrot.slane %v922, 1
        %v928 = vsel %vm826, %v926, 0
        %v931 = vsel %vm830, %v924, 0
        %933 = vmatprep.subr.bf16.mxu0 0
        %934 = vmatpush1.bf16.msra.mxu0 %v931
        %935 = vmatprep.subr.bf16.mxu0 0
        %936 = vmatpush1.bf16.msra.mxu0 0
        %937 = vmatprep.subr.bf16.mxu0 0
        %938 = vmatpush1.bf16.msra.mxu0 0
        %939 = vmatprep.subr.bf16.mxu0 0
        %940 = vmatpush1.bf16.msra.mxu0 0
        %941 = vmatprep.subr.bf16.mxu0 0
        %942 = vmatpush1.bf16.msra.mxu0 0
        %943 = vmatprep.subr.bf16.mxu0 0
        %944 = vmatpush1.bf16.msra.mxu0 0
        %945 = vmatprep.subr.bf16.mxu0 0
        %946 = vmatpush1.bf16.msra.mxu0 0
        %947 = vmatprep.subr.bf16.mxu0 0
        %948 = vmatpush1.bf16.msra.mxu0 0
        %949 = vmatprep.subr.bf16.mxu0 0
        %950 = vmatpush1.bf16.msra.mxu0 0
        %951 = vmatprep.subr.bf16.mxu0 0
        %952 = vmatpush1.bf16.msra.mxu0 0
        %953 = vmatprep.subr.bf16.mxu0 0
        %954 = vmatpush1.bf16.msra.mxu0 0
        %955 = vmatprep.subr.bf16.mxu0 0
        %956 = vmatpush1.bf16.msra.mxu0 0
        %957 = vmatprep.subr.bf16.mxu0 0
        %958 = vmatpush1.bf16.msra.mxu0 0
        %959 = vmatprep.subr.bf16.mxu0 0
        %960 = vmatpush1.bf16.msra.mxu0 0
        %961 = vmatprep.subr.bf16.mxu0 0
        %962 = vmatpush1.bf16.msra.mxu0 0
        %963 = vmatprep.subr.bf16.mxu0 0
        %964 = vmatpush1.bf16.msra.mxu0 0
        %965 = vmatprep.mubr.bf16.mxu0 0
        %966 = vmatmul.mubr.bf16.gmra.mrb[0].mxu0 %v928
        %v967 = vpop.f32.mrb[0].mxu0
        %v968 = vadd.f32 0.0, %v967
        %v969 = vpop.f32.mrb[0].mxu0
        %v970 = vpop.f32.mrb[0].mxu0
        %v971 = vadd.f32 0.0, %v970
        %v972 = vpop.f32.mrb[0].mxu0
        %973 = vdwg.mxu0
        %v974 = vadd.f32 %v916, %v968
        %v975 = vadd.f32 %v919, %v971
        %v976 = vpack.c.bf16 %v781, %v776
        %s977 = scalar_lea.vmem %s3, 6
        %v978 = vld [vmem:[%s977] sm:$0x3]
        %v980 = vshrl.u32 %v976, 16
        %v982 = vrot.slane %v980, 1
        %v983 = vshll.u32 %v976, 16
        %v985 = vrot.slane %v983, 2
        %v986 = vor.u32 %v982, %v985
        %v988 = vsel %vm826, %v986, 0
        %v991 = vsel %vm830, %v978, 0
        %993 = vmatprep.subr.bf16.mxu0 0
        %994 = vmatpush1.bf16.msra.mxu0 %v991
        %995 = vmatprep.subr.bf16.mxu0 0
        %996 = vmatpush1.bf16.msra.mxu0 0
        %997 = vmatprep.subr.bf16.mxu0 0
        %998 = vmatpush1.bf16.msra.mxu0 0
        %999 = vmatprep.subr.bf16.mxu0 0
        %1000 = vmatpush1.bf16.msra.mxu0 0
        %1001 = vmatprep.subr.bf16.mxu0 0
        %1002 = vmatpush1.bf16.msra.mxu0 0
        %1003 = vmatprep.subr.bf16.mxu0 0
        %1004 = vmatpush1.bf16.msra.mxu0 0
        %1005 = vmatprep.subr.bf16.mxu0 0
        %1006 = vmatpush1.bf16.msra.mxu0 0
        %1007 = vmatprep.subr.bf16.mxu0 0
        %1008 = vmatpush1.bf16.msra.mxu0 0
        %1009 = vmatprep.subr.bf16.mxu0 0
        %1010 = vmatpush1.bf16.msra.mxu0 0
        %1011 = vmatprep.subr.bf16.mxu0 0
        %1012 = vmatpush1.bf16.msra.mxu0 0
        %1013 = vmatprep.subr.bf16.mxu0 0
        %1014 = vmatpush1.bf16.msra.mxu0 0
        %1015 = vmatprep.subr.bf16.mxu0 0
        %1016 = vmatpush1.bf16.msra.mxu0 0
        %1017 = vmatprep.subr.bf16.mxu0 0
        %1018 = vmatpush1.bf16.msra.mxu0 0
        %1019 = vmatprep.subr.bf16.mxu0 0
        %1020 = vmatpush1.bf16.msra.mxu0 0
        %1021 = vmatprep.subr.bf16.mxu0 0
        %1022 = vmatpush1.bf16.msra.mxu0 0
        %1023 = vmatprep.subr.bf16.mxu0 0
        %1024 = vmatpush1.bf16.msra.mxu0 0
        %1025 = vmatprep.mubr.bf16.mxu0 0
        %1026 = vmatmul.mubr.bf16.gmra.mrb[0].mxu0 %v988
        %v1027 = vpop.f32.mrb[0].mxu0
        %v1028 = vadd.f32 0.0, %v1027
        %v1029 = vpop.f32.mrb[0].mxu0
        %v1030 = vpop.f32.mrb[0].mxu0
        %v1031 = vadd.f32 0.0, %v1030
        %v1032 = vpop.f32.mrb[0].mxu0
        %1033 = vdwg.mxu0
        %v1034 = vadd.f32 %v974, %v1028
        %v1035 = vadd.f32 %v975, %v1031
        %v1036 = vpack.c.bf16 %v786, %v781
        %s1037 = scalar_lea.vmem %s3, 8
        %v1038 = vld [vmem:[%s1037] sm:$0x3]
        %v1040 = vrot.slane %v1036, 2
        %v1042 = vsel %vm826, %v1040, 0
        %v1045 = vsel %vm830, %v1038, 0
        %1047 = vmatprep.subr.bf16.mxu0 0
        %1048 = vmatpush1.bf16.msra.mxu0 %v1045
        %1049 = vmatprep.subr.bf16.mxu0 0
        %1050 = vmatpush1.bf16.msra.mxu0 0
        %1051 = vmatprep.subr.bf16.mxu0 0
        %1052 = vmatpush1.bf16.msra.mxu0 0
        %1053 = vmatprep.subr.bf16.mxu0 0
        %1054 = vmatpush1.bf16.msra.mxu0 0
        %1055 = vmatprep.subr.bf16.mxu0 0
        %1056 = vmatpush1.bf16.msra.mxu0 0
        %1057 = vmatprep.subr.bf16.mxu0 0
        %1058 = vmatpush1.bf16.msra.mxu0 0
        %1059 = vmatprep.subr.bf16.mxu0 0
        %1060 = vmatpush1.bf16.msra.mxu0 0
        %1061 = vmatprep.subr.bf16.mxu0 0
        %1062 = vmatpush1.bf16.msra.mxu0 0
        %1063 = vmatprep.subr.bf16.mxu0 0
        %1064 = vmatpush1.bf16.msra.mxu0 0
        %1065 = vmatprep.subr.bf16.mxu0 0
        %1066 = vmatpush1.bf16.msra.mxu0 0
        %1067 = vmatprep.subr.bf16.mxu0 0
        %1068 = vmatpush1.bf16.msra.mxu0 0
        %1069 = vmatprep.subr.bf16.mxu0 0
        %1070 = vmatpush1.bf16.msra.mxu0 0
        %1071 = vmatprep.subr.bf16.mxu0 0
        %1072 = vmatpush1.bf16.msra.mxu0 0
        %1073 = vmatprep.subr.bf16.mxu0 0
        %1074 = vmatpush1.bf16.msra.mxu0 0
        %1075 = vmatprep.subr.bf16.mxu0 0
        %1076 = vmatpush1.bf16.msra.mxu0 0
        %1077 = vmatprep.subr.bf16.mxu0 0
        %1078 = vmatpush1.bf16.msra.mxu0 0
        %1079 = vmatprep.mubr.bf16.mxu0 0
        %1080 = vmatmul.mubr.bf16.gmra.mrb[0].mxu0 %v1042
        %v1081 = vpop.f32.mrb[0].mxu0
        %v1082 = vadd.f32 0.0, %v1081
        %v1083 = vpop.f32.mrb[0].mxu0
        %v1084 = vpop.f32.mrb[0].mxu0
        %v1085 = vadd.f32 0.0, %v1084
        %v1086 = vpop.f32.mrb[0].mxu0
        %1087 = vdwg.mxu0
        %v1088 = vadd.f32 %v1034, %v1082
        %v1089 = vadd.f32 %v1035, %v1085
        %v1090 = vpack.c.bf16 %v791, %v786
        %s1091 = scalar_lea.vmem %s3, 10
        %v1092 = vld [vmem:[%s1091] sm:$0x3]
        %v1094 = vshrl.u32 %v1090, 16
        %v1096 = vrot.slane %v1094, 2
        %v1097 = vshll.u32 %v1090, 16
        %v1099 = vrot.slane %v1097, 3
        %v1100 = vor.u32 %v1096, %v1099
        %v1102 = vsel %vm826, %v1100, 0
        %v1105 = vsel %vm830, %v1092, 0
        %1107 = vmatprep.subr.bf16.mxu0 0
        %1108 = vmatpush1.bf16.msra.mxu0 %v1105
        %1109 = vmatprep.subr.bf16.mxu0 0
        %1110 = vmatpush1.bf16.msra.mxu0 0
        %1111 = vmatprep.subr.bf16.mxu0 0
        %1112 = vmatpush1.bf16.msra.mxu0 0
        %1113 = vmatprep.subr.bf16.mxu0 0
        %1114 = vmatpush1.bf16.msra.mxu0 0
        %1115 = vmatprep.subr.bf16.mxu0 0
        %1116 = vmatpush1.bf16.msra.mxu0 0
        %1117 = vmatprep.subr.bf16.mxu0 0
        %1118 = vmatpush1.bf16.msra.mxu0 0
        %1119 = vmatprep.subr.bf16.mxu0 0
        %1120 = vmatpush1.bf16.msra.mxu0 0
        %1121 = vmatprep.subr.bf16.mxu0 0
        %1122 = vmatpush1.bf16.msra.mxu0 0
        %1123 = vmatprep.subr.bf16.mxu0 0
        %1124 = vmatpush1.bf16.msra.mxu0 0
        %1125 = vmatprep.subr.bf16.mxu0 0
        %1126 = vmatpush1.bf16.msra.mxu0 0
        %1127 = vmatprep.subr.bf16.mxu0 0
        %1128 = vmatpush1.bf16.msra.mxu0 0
        %1129 = vmatprep.subr.bf16.mxu0 0
        %1130 = vmatpush1.bf16.msra.mxu0 0
        %1131 = vmatprep.subr.bf16.mxu0 0
        %1132 = vmatpush1.bf16.msra.mxu0 0
        %1133 = vmatprep.subr.bf16.mxu0 0
        %1134 = vmatpush1.bf16.msra.mxu0 0
        %1135 = vmatprep.subr.bf16.mxu0 0
        %1136 = vmatpush1.bf16.msra.mxu0 0
        %1137 = vmatprep.subr.bf16.mxu0 0
        %1138 = vmatpush1.bf16.msra.mxu0 0
        %1139 = vmatprep.mubr.bf16.mxu0 0
        %1140 = vmatmul.mubr.bf16.gmra.mrb[0].mxu0 %v1102
        %v1141 = vpop.f32.mrb[0].mxu0
        %v1142 = vadd.f32 0.0, %v1141
        %v1143 = vpop.f32.mrb[0].mxu0
        %v1144 = vpop.f32.mrb[0].mxu0
        %v1145 = vadd.f32 0.0, %v1144
        %v1146 = vpop.f32.mrb[0].mxu0
        %1147 = vdwg.mxu0
        %v1148 = vadd.f32 %v1088, %v1142
        %v1149 = vadd.f32 %v1089, %v1145
        %v1150 = vpack.c.bf16 %v796, %v791
        %s1151 = scalar_lea.vmem %s3, 12
        %v1152 = vld [vmem:[%s1151] sm:$0x3]
        %v1154 = vrot.slane %v1150, 3
        %v1156 = vsel %vm826, %v1154, 0
        %v1159 = vsel %vm830, %v1152, 0
        %1161 = vmatprep.subr.bf16.mxu0 0
        %1162 = vmatpush1.bf16.msra.mxu0 %v1159
        %1163 = vmatprep.subr.bf16.mxu0 0
        %1164 = vmatpush1.bf16.msra.mxu0 0
        %1165 = vmatprep.subr.bf16.mxu0 0
        %1166 = vmatpush1.bf16.msra.mxu0 0
        %1167 = vmatprep.subr.bf16.mxu0 0
        %1168 = vmatpush1.bf16.msra.mxu0 0
        %1169 = vmatprep.subr.bf16.mxu0 0
        %1170 = vmatpush1.bf16.msra.mxu0 0
        %1171 = vmatprep.subr.bf16.mxu0 0
        %1172 = vmatpush1.bf16.msra.mxu0 0
        %1173 = vmatprep.subr.bf16.mxu0 0
        %1174 = vmatpush1.bf16.msra.mxu0 0
        %1175 = vmatprep.subr.bf16.mxu0 0
        %1176 = vmatpush1.bf16.msra.mxu0 0
        %1177 = vmatprep.subr.bf16.mxu0 0
        %1178 = vmatpush1.bf16.msra.mxu0 0
        %1179 = vmatprep.subr.bf16.mxu0 0
        %1180 = vmatpush1.bf16.msra.mxu0 0
        %1181 = vmatprep.subr.bf16.mxu0 0
        %1182 = vmatpush1.bf16.msra.mxu0 0
        %1183 = vmatprep.subr.bf16.mxu0 0
        %1184 = vmatpush1.bf16.msra.mxu0 0
        %1185 = vmatprep.subr.bf16.mxu0 0
        %1186 = vmatpush1.bf16.msra.mxu0 0
        %1187 = vmatprep.subr.bf16.mxu0 0
        %1188 = vmatpush1.bf16.msra.mxu0 0
        %1189 = vmatprep.subr.bf16.mxu0 0
        %1190 = vmatpush1.bf16.msra.mxu0 0
        %1191 = vmatprep.subr.bf16.mxu0 0
        %1192 = vmatpush1.bf16.msra.mxu0 0
        %1193 = vmatprep.mubr.bf16.mxu0 0
        %1194 = vmatmul.mubr.bf16.gmra.mrb[0].mxu0 %v1156
        %v1195 = vpop.f32.mrb[0].mxu0
        %v1196 = vadd.f32 0.0, %v1195
        %v1197 = vpop.f32.mrb[0].mxu0
        %v1198 = vpop.f32.mrb[0].mxu0
        %v1199 = vadd.f32 0.0, %v1198
        %v1200 = vpop.f32.mrb[0].mxu0
        %1201 = vdwg.mxu0
        %v1202 = vadd.f32 %v1148, %v1196
        %v1203 = vadd.f32 %v1149, %v1199
        %v1204 = vpack.c.bf16 %v801, %v796
        %s1205 = scalar_lea.vmem %s3, 14
        %v1206 = vld [vmem:[%s1205] sm:$0x3]
        %v1208 = vshrl.u32 %v1204, 16
        %v1210 = vrot.slane %v1208, 3
        %v1211 = vshll.u32 %v1204, 16
        %v1213 = vrot.slane %v1211, 4
        %v1214 = vor.u32 %v1210, %v1213
        %v1216 = vsel %vm826, %v1214, 0
        %v1219 = vsel %vm830, %v1206, 0
        %1221 = vmatprep.subr.bf16.mxu0 0
        %1222 = vmatpush1.bf16.msra.mxu0 %v1219
        %1223 = vmatprep.subr.bf16.mxu0 0
        %1224 = vmatpush1.bf16.msra.mxu0 0
        %1225 = vmatprep.subr.bf16.mxu0 0
        %1226 = vmatpush1.bf16.msra.mxu0 0
        %1227 = vmatprep.subr.bf16.mxu0 0
        %1228 = vmatpush1.bf16.msra.mxu0 0
        %1229 = vmatprep.subr.bf16.mxu0 0
        %1230 = vmatpush1.bf16.msra.mxu0 0
        %1231 = vmatprep.subr.bf16.mxu0 0
        %1232 = vmatpush1.bf16.msra.mxu0 0
        %1233 = vmatprep.subr.bf16.mxu0 0
        %1234 = vmatpush1.bf16.msra.mxu0 0
        %1235 = vmatprep.subr.bf16.mxu0 0
        %1236 = vmatpush1.bf16.msra.mxu0 0
        %1237 = vmatprep.subr.bf16.mxu0 0
        %1238 = vmatpush1.bf16.msra.mxu0 0
        %1239 = vmatprep.subr.bf16.mxu0 0
        %1240 = vmatpush1.bf16.msra.mxu0 0
        %1241 = vmatprep.subr.bf16.mxu0 0
        %1242 = vmatpush1.bf16.msra.mxu0 0
        %1243 = vmatprep.subr.bf16.mxu0 0
        %1244 = vmatpush1.bf16.msra.mxu0 0
        %1245 = vmatprep.subr.bf16.mxu0 0
        %1246 = vmatpush1.bf16.msra.mxu0 0
        %1247 = vmatprep.subr.bf16.mxu0 0
        %1248 = vmatpush1.bf16.msra.mxu0 0
        %1249 = vmatprep.subr.bf16.mxu0 0
        %1250 = vmatpush1.bf16.msra.mxu0 0
        %1251 = vmatprep.subr.bf16.mxu0 0
        %1252 = vmatpush1.bf16.msra.mxu0 0
        %1253 = vmatprep.mubr.bf16.mxu0 0
        %1254 = vmatmul.mubr.bf16.gmra.mrb[0].mxu0 %v1216
        %v1255 = vpop.f32.mrb[0].mxu0
        %v1256 = vadd.f32 0.0, %v1255
        %v1257 = vpop.f32.mrb[0].mxu0
        %v1258 = vpop.f32.mrb[0].mxu0
        %v1259 = vadd.f32 0.0, %v1258
        %v1260 = vpop.f32.mrb[0].mxu0
        %1261 = vdwg.mxu0
        %v1262 = vadd.f32 %v1202, %v1256
        %v1263 = vadd.f32 %v1203, %v1259
        %v1264 = vpack.c.bf16 %v811, %v806
        %s1265 = scalar_lea.vmem %s3, 16
        %v1266 = vld [vmem:[%s1265] sm:$0x3]
        %v1268 = vsel %vm826, %v1264, 0
        %v1271 = vsel %vm830, %v1266, 0
        %1273 = vmatprep.subr.bf16.mxu0 0
        %1274 = vmatpush1.bf16.msra.mxu0 %v1271
        %1275 = vmatprep.subr.bf16.mxu0 0
        %1276 = vmatpush1.bf16.msra.mxu0 0
        %1277 = vmatprep.subr.bf16.mxu0 0
        %1278 = vmatpush1.bf16.msra.mxu0 0
        %1279 = vmatprep.subr.bf16.mxu0 0
        %1280 = vmatpush1.bf16.msra.mxu0 0
        %1281 = vmatprep.subr.bf16.mxu0 0
        %1282 = vmatpush1.bf16.msra.mxu0 0
        %1283 = vmatprep.subr.bf16.mxu0 0
        %1284 = vmatpush1.bf16.msra.mxu0 0
        %1285 = vmatprep.subr.bf16.mxu0 0
        %1286 = vmatpush1.bf16.msra.mxu0 0
        %1287 = vmatprep.subr.bf16.mxu0 0
        %1288 = vmatpush1.bf16.msra.mxu0 0
        %1289 = vmatprep.subr.bf16.mxu0 0
        %1290 = vmatpush1.bf16.msra.mxu0 0
        %1291 = vmatprep.subr.bf16.mxu0 0
        %1292 = vmatpush1.bf16.msra.mxu0 0
        %1293 = vmatprep.subr.bf16.mxu0 0
        %1294 = vmatpush1.bf16.msra.mxu0 0
        %1295 = vmatprep.subr.bf16.mxu0 0
        %1296 = vmatpush1.bf16.msra.mxu0 0
        %1297 = vmatprep.subr.bf16.mxu0 0
        %1298 = vmatpush1.bf16.msra.mxu0 0
        %1299 = vmatprep.subr.bf16.mxu0 0
        %1300 = vmatpush1.bf16.msra.mxu0 0
        %1301 = vmatprep.subr.bf16.mxu0 0
        %1302 = vmatpush1.bf16.msra.mxu0 0
        %1303 = vmatprep.subr.bf16.mxu0 0
        %1304 = vmatpush1.bf16.msra.mxu0 0
        %1305 = vmatprep.mubr.bf16.mxu0 0
        %1306 = vmatmul.mubr.bf16.gmra.mrb[0].mxu0 %v1268
        %v1307 = vpop.f32.mrb[0].mxu0
        %v1308 = vadd.f32 0.0, %v1307
        %v1309 = vpop.f32.mrb[0].mxu0
        %v1310 = vpop.f32.mrb[0].mxu0
        %v1311 = vadd.f32 0.0, %v1310
        %v1312 = vpop.f32.mrb[0].mxu0
        %1313 = vdwg.mxu0
        %v1314 = vadd.f32 %v1262, %v1308
        %v1315 = vadd.f32 %v1263, %v1311
        %v1316 = vld [vmem:[%s4] sm:$0x1]
        %v1318 = vlaneseq
        %v1319 = vshrl.u32 %v1318, 7
        %v1320 = vsub.s32 0, %v1319
        %v1321 = vrot.slane %v1316, %v1320
        %v1323 = vadd.f32 %v1314, %v1321
        %v1324 = vadd.f32 %v1315, %v1321
        %vm1325 = vcmp.ge.f32.partialorder %v1323, 0.0
        %vm1326 = vcmp.ge.f32.partialorder %v1324, 0.0
        %v1327 = vld [vmem:[%s5] sm:$0x1]
        %v1329 = vlaneseq
        %v1330 = vshrl.u32 %v1329, 7
        %v1331 = vsub.s32 0, %v1330
        %v1332 = vrot.slane %v1327, %v1331
        %v1334 = vmul.f32 %v1332, %v1323
        %v1335 = vmul.f32 %v1332, %v1324
        %v1336 = vsel %vm1325, %v1323, %v1334
        %v1337 = vsel %vm1326, %v1324, %v1335
        %v1338 = vpack.c.bf16 %v1336, %v1336
        %v1339 = vld [vmem:[%s6] sm:$0x3]
        %s1340 = scalar_lea.vmem %s6, 2
        %v1341 = vld [vmem:[%s1340] sm:$0x3]
        %v1343 = vshrl.u32 %v1338, 16
        %v1346 = vsel %vm826, %v1343, 0
        %v1349 = vsel %vm830, %v1341, 0
        %1351 = vmatprep.subr.bf16.mxu0 0
        %1352 = vmatpush1.bf16.msra.mxu0 %v1349
        %1353 = vmatprep.subr.bf16.mxu0 0
        %1354 = vmatpush1.bf16.msra.mxu0 0
        %1355 = vmatprep.subr.bf16.mxu0 0
        %1356 = vmatpush1.bf16.msra.mxu0 0
        %1357 = vmatprep.subr.bf16.mxu0 0
        %1358 = vmatpush1.bf16.msra.mxu0 0
        %1359 = vmatprep.subr.bf16.mxu0 0
        %1360 = vmatpush1.bf16.msra.mxu0 0
        %1361 = vmatprep.subr.bf16.mxu0 0
        %1362 = vmatpush1.bf16.msra.mxu0 0
        %1363 = vmatprep.subr.bf16.mxu0 0
        %1364 = vmatpush1.bf16.msra.mxu0 0
        %1365 = vmatprep.subr.bf16.mxu0 0
        %1366 = vmatpush1.bf16.msra.mxu0 0
        %1367 = vmatprep.subr.bf16.mxu0 0
        %1368 = vmatpush1.bf16.msra.mxu0 0
        %1369 = vmatprep.subr.bf16.mxu0 0
        %1370 = vmatpush1.bf16.msra.mxu0 0
        %1371 = vmatprep.subr.bf16.mxu0 0
        %1372 = vmatpush1.bf16.msra.mxu0 0
        %1373 = vmatprep.subr.bf16.mxu0 0
        %1374 = vmatpush1.bf16.msra.mxu0 0
        %1375 = vmatprep.subr.bf16.mxu0 0
        %1376 = vmatpush1.bf16.msra.mxu0 0
        %1377 = vmatprep.subr.bf16.mxu0 0
        %1378 = vmatpush1.bf16.msra.mxu0 0
        %1379 = vmatprep.subr.bf16.mxu0 0
        %1380 = vmatpush1.bf16.msra.mxu0 0
        %1381 = vmatprep.subr.bf16.mxu0 0
        %1382 = vmatpush1.bf16.msra.mxu0 0
        %1383 = vmatprep.mubr.bf16.mxu0 0
        %1384 = vmatmul.mubr.bf16.gmra.mrb[0].mxu0 %v1346
        %v1385 = vpop.f32.mrb[0].mxu0
        %v1386 = vadd.f32 0.0, %v1385
        %v1387 = vpop.f32.mrb[0].mxu0
        %v1388 = vpop.f32.mrb[0].mxu0
        %v1389 = vpop.f32.mrb[0].mxu0
        %1390 = vdwg.mxu0
        %v1391 = vsel %vm826, %v1338, 0
        %v1394 = vsel %vm830, %v1339, 0
        %1396 = vmatprep.subr.bf16.mxu0 0
        %1397 = vmatpush1.bf16.msra.mxu0 %v1394
        %1398 = vmatprep.subr.bf16.mxu0 0
        %1399 = vmatpush1.bf16.msra.mxu0 0
        %1400 = vmatprep.subr.bf16.mxu0 0
        %1401 = vmatpush1.bf16.msra.mxu0 0
        %1402 = vmatprep.subr.bf16.mxu0 0
        %1403 = vmatpush1.bf16.msra.mxu0 0
        %1404 = vmatprep.subr.bf16.mxu0 0
        %1405 = vmatpush1.bf16.msra.mxu0 0
        %1406 = vmatprep.subr.bf16.mxu0 0
        %1407 = vmatpush1.bf16.msra.mxu0 0
        %1408 = vmatprep.subr.bf16.mxu0 0
        %1409 = vmatpush1.bf16.msra.mxu0 0
        %1410 = vmatprep.subr.bf16.mxu0 0
        %1411 = vmatpush1.bf16.msra.mxu0 0
        %1412 = vmatprep.subr.bf16.mxu0 0
        %1413 = vmatpush1.bf16.msra.mxu0 0
        %1414 = vmatprep.subr.bf16.mxu0 0
        %1415 = vmatpush1.bf16.msra.mxu0 0
        %1416 = vmatprep.subr.bf16.mxu0 0
        %1417 = vmatpush1.bf16.msra.mxu0 0
        %1418 = vmatprep.subr.bf16.mxu0 0
        %1419 = vmatpush1.bf16.msra.mxu0 0
        %1420 = vmatprep.subr.bf16.mxu0 0
        %1421 = vmatpush1.bf16.msra.mxu0 0
        %1422 = vmatprep.subr.bf16.mxu0 0
        %1423 = vmatpush1.bf16.msra.mxu0 0
        %1424 = vmatprep.subr.bf16.mxu0 0
        %1425 = vmatpush1.bf16.msra.mxu0 0
        %1426 = vmatprep.subr.bf16.mxu0 0
        %1427 = vmatpush1.bf16.msra.mxu0 0
        %1428 = vmatprep.mubr.bf16.mxu0 0
        %1429 = vmatmul.mubr.bf16.gmra.mrb[0].mxu0 %v1391
        %v1430 = vpop.f32.mrb[0].mxu0
        %v1431 = vadd.f32 %v1386, %v1430
        %v1432 = vpop.f32.mrb[0].mxu0
        %v1433 = vpop.f32.mrb[0].mxu0
        %v1434 = vpop.f32.mrb[0].mxu0
        %1435 = vdwg.mxu0
        %s1436 = scalar_lea.vmem %s6, 4
        %v1437 = vld [vmem:[%s1436] sm:$0x3]
        %v1439 = vrot.slane %v1338, 1
        %v1441 = vsel %vm826, %v1439, 0
        %v1444 = vsel %vm830, %v1437, 0
        %1446 = vmatprep.subr.bf16.mxu0 0
        %1447 = vmatpush1.bf16.msra.mxu0 %v1444
        %1448 = vmatprep.subr.bf16.mxu0 0
        %1449 = vmatpush1.bf16.msra.mxu0 0
        %1450 = vmatprep.subr.bf16.mxu0 0
        %1451 = vmatpush1.bf16.msra.mxu0 0
        %1452 = vmatprep.subr.bf16.mxu0 0
        %1453 = vmatpush1.bf16.msra.mxu0 0
        %1454 = vmatprep.subr.bf16.mxu0 0
        %1455 = vmatpush1.bf16.msra.mxu0 0
        %1456 = vmatprep.subr.bf16.mxu0 0
        %1457 = vmatpush1.bf16.msra.mxu0 0
        %1458 = vmatprep.subr.bf16.mxu0 0
        %1459 = vmatpush1.bf16.msra.mxu0 0
        %1460 = vmatprep.subr.bf16.mxu0 0
        %1461 = vmatpush1.bf16.msra.mxu0 0
        %1462 = vmatprep.subr.bf16.mxu0 0
        %1463 = vmatpush1.bf16.msra.mxu0 0
        %1464 = vmatprep.subr.bf16.mxu0 0
        %1465 = vmatpush1.bf16.msra.mxu0 0
        %1466 = vmatprep.subr.bf16.mxu0 0
        %1467 = vmatpush1.bf16.msra.mxu0 0
        %1468 = vmatprep.subr.bf16.mxu0 0
        %1469 = vmatpush1.bf16.msra.mxu0 0
        %1470 = vmatprep.subr.bf16.mxu0 0
        %1471 = vmatpush1.bf16.msra.mxu0 0
        %1472 = vmatprep.subr.bf16.mxu0 0
        %1473 = vmatpush1.bf16.msra.mxu0 0
        %1474 = vmatprep.subr.bf16.mxu0 0
        %1475 = vmatpush1.bf16.msra.mxu0 0
        %1476 = vmatprep.subr.bf16.mxu0 0
        %1477 = vmatpush1.bf16.msra.mxu0 0
        %1478 = vmatprep.mubr.bf16.mxu0 0
        %1479 = vmatmul.mubr.bf16.gmra.mrb[0].mxu0 %v1441
        %v1480 = vpop.f32.mrb[0].mxu0
        %v1481 = vadd.f32 0.0, %v1480
        %v1482 = vpop.f32.mrb[0].mxu0
        %v1483 = vpop.f32.mrb[0].mxu0
        %v1484 = vpop.f32.mrb[0].mxu0
        %1485 = vdwg.mxu0
        %v1486 = vadd.f32 %v1431, %v1481
        %s1487 = scalar_lea.vmem %s6, 6
        %v1488 = vld [vmem:[%s1487] sm:$0x3]
        %v1489 = vrot.slane %v1343, 1
        %v1491 = vsel %vm826, %v1489, 0
        %v1494 = vsel %vm830, %v1488, 0
        %1496 = vmatprep.subr.bf16.mxu0 0
        %1497 = vmatpush1.bf16.msra.mxu0 %v1494
        %1498 = vmatprep.subr.bf16.mxu0 0
        %1499 = vmatpush1.bf16.msra.mxu0 0
        %1500 = vmatprep.subr.bf16.mxu0 0
        %1501 = vmatpush1.bf16.msra.mxu0 0
        %1502 = vmatprep.subr.bf16.mxu0 0
        %1503 = vmatpush1.bf16.msra.mxu0 0
        %1504 = vmatprep.subr.bf16.mxu0 0
        %1505 = vmatpush1.bf16.msra.mxu0 0
        %1506 = vmatprep.subr.bf16.mxu0 0
        %1507 = vmatpush1.bf16.msra.mxu0 0
        %1508 = vmatprep.subr.bf16.mxu0 0
        %1509 = vmatpush1.bf16.msra.mxu0 0
        %1510 = vmatprep.subr.bf16.mxu0 0
        %1511 = vmatpush1.bf16.msra.mxu0 0
        %1512 = vmatprep.subr.bf16.mxu0 0
        %1513 = vmatpush1.bf16.msra.mxu0 0
        %1514 = vmatprep.subr.bf16.mxu0 0
        %1515 = vmatpush1.bf16.msra.mxu0 0
        %1516 = vmatprep.subr.bf16.mxu0 0
        %1517 = vmatpush1.bf16.msra.mxu0 0
        %1518 = vmatprep.subr.bf16.mxu0 0
        %1519 = vmatpush1.bf16.msra.mxu0 0
        %1520 = vmatprep.subr.bf16.mxu0 0
        %1521 = vmatpush1.bf16.msra.mxu0 0
        %1522 = vmatprep.subr.bf16.mxu0 0
        %1523 = vmatpush1.bf16.msra.mxu0 0
        %1524 = vmatprep.subr.bf16.mxu0 0
        %1525 = vmatpush1.bf16.msra.mxu0 0
        %1526 = vmatprep.subr.bf16.mxu0 0
        %1527 = vmatpush1.bf16.msra.mxu0 0
        %1528 = vmatprep.mubr.bf16.mxu0 0
        %1529 = vmatmul.mubr.bf16.gmra.mrb[0].mxu0 %v1491
        %v1530 = vpop.f32.mrb[0].mxu0
        %v1531 = vadd.f32 0.0, %v1530
        %v1532 = vpop.f32.mrb[0].mxu0
        %v1533 = vpop.f32.mrb[0].mxu0
        %v1534 = vpop.f32.mrb[0].mxu0
        %1535 = vdwg.mxu0
        %v1536 = vadd.f32 %v1486, %v1531
        %s1537 = scalar_lea.vmem %s6, 8
        %v1538 = vld [vmem:[%s1537] sm:$0x3]
        %v1539 = vrot.slane %v1338, 2
        %v1541 = vsel %vm826, %v1539, 0
        %v1544 = vsel %vm830, %v1538, 0
        %1546 = vmatprep.subr.bf16.mxu0 0
        %1547 = vmatpush1.bf16.msra.mxu0 %v1544
        %1548 = vmatprep.subr.bf16.mxu0 0
        %1549 = vmatpush1.bf16.msra.mxu0 0
        %1550 = vmatprep.subr.bf16.mxu0 0
        %1551 = vmatpush1.bf16.msra.mxu0 0
        %1552 = vmatprep.subr.bf16.mxu0 0
        %1553 = vmatpush1.bf16.msra.mxu0 0
        %1554 = vmatprep.subr.bf16.mxu0 0
        %1555 = vmatpush1.bf16.msra.mxu0 0
        %1556 = vmatprep.subr.bf16.mxu0 0
        %1557 = vmatpush1.bf16.msra.mxu0 0
        %1558 = vmatprep.subr.bf16.mxu0 0
        %1559 = vmatpush1.bf16.msra.mxu0 0
        %1560 = vmatprep.subr.bf16.mxu0 0
        %1561 = vmatpush1.bf16.msra.mxu0 0
        %1562 = vmatprep.subr.bf16.mxu0 0
        %1563 = vmatpush1.bf16.msra.mxu0 0
        %1564 = vmatprep.subr.bf16.mxu0 0
        %1565 = vmatpush1.bf16.msra.mxu0 0
        %1566 = vmatprep.subr.bf16.mxu0 0
        %1567 = vmatpush1.bf16.msra.mxu0 0
        %1568 = vmatprep.subr.bf16.mxu0 0
        %1569 = vmatpush1.bf16.msra.mxu0 0
        %1570 = vmatprep.subr.bf16.mxu0 0
        %1571 = vmatpush1.bf16.msra.mxu0 0
        %1572 = vmatprep.subr.bf16.mxu0 0
        %1573 = vmatpush1.bf16.msra.mxu0 0
        %1574 = vmatprep.subr.bf16.mxu0 0
        %1575 = vmatpush1.bf16.msra.mxu0 0
        %1576 = vmatprep.subr.bf16.mxu0 0
        %1577 = vmatpush1.bf16.msra.mxu0 0
        %1578 = vmatprep.mubr.bf16.mxu0 0
        %1579 = vmatmul.mubr.bf16.gmra.mrb[0].mxu0 %v1541
        %v1580 = vpop.f32.mrb[0].mxu0
        %v1581 = vadd.f32 0.0, %v1580
        %v1582 = vpop.f32.mrb[0].mxu0
        %v1583 = vpop.f32.mrb[0].mxu0
        %v1584 = vpop.f32.mrb[0].mxu0
        %1585 = vdwg.mxu0
        %v1586 = vadd.f32 %v1536, %v1581
        %s1587 = scalar_lea.vmem %s6, 10
        %v1588 = vld [vmem:[%s1587] sm:$0x3]
        %v1589 = vrot.slane %v1343, 2
        %v1591 = vsel %vm826, %v1589, 0
        %v1594 = vsel %vm830, %v1588, 0
        %1596 = vmatprep.subr.bf16.mxu0 0
        %1597 = vmatpush1.bf16.msra.mxu0 %v1594
        %1598 = vmatprep.subr.bf16.mxu0 0
        %1599 = vmatpush1.bf16.msra.mxu0 0
        %1600 = vmatprep.subr.bf16.mxu0 0
        %1601 = vmatpush1.bf16.msra.mxu0 0
        %1602 = vmatprep.subr.bf16.mxu0 0
        %1603 = vmatpush1.bf16.msra.mxu0 0
        %1604 = vmatprep.subr.bf16.mxu0 0
        %1605 = vmatpush1.bf16.msra.mxu0 0
        %1606 = vmatprep.subr.bf16.mxu0 0
        %1607 = vmatpush1.bf16.msra.mxu0 0
        %1608 = vmatprep.subr.bf16.mxu0 0
        %1609 = vmatpush1.bf16.msra.mxu0 0
        %1610 = vmatprep.subr.bf16.mxu0 0
        %1611 = vmatpush1.bf16.msra.mxu0 0
        %1612 = vmatprep.subr.bf16.mxu0 0
        %1613 = vmatpush1.bf16.msra.mxu0 0
        %1614 = vmatprep.subr.bf16.mxu0 0
        %1615 = vmatpush1.bf16.msra.mxu0 0
        %1616 = vmatprep.subr.bf16.mxu0 0
        %1617 = vmatpush1.bf16.msra.mxu0 0
        %1618 = vmatprep.subr.bf16.mxu0 0
        %1619 = vmatpush1.bf16.msra.mxu0 0
        %1620 = vmatprep.subr.bf16.mxu0 0
        %1621 = vmatpush1.bf16.msra.mxu0 0
        %1622 = vmatprep.subr.bf16.mxu0 0
        %1623 = vmatpush1.bf16.msra.mxu0 0
        %1624 = vmatprep.subr.bf16.mxu0 0
        %1625 = vmatpush1.bf16.msra.mxu0 0
        %1626 = vmatprep.subr.bf16.mxu0 0
        %1627 = vmatpush1.bf16.msra.mxu0 0
        %1628 = vmatprep.mubr.bf16.mxu0 0
        %1629 = vmatmul.mubr.bf16.gmra.mrb[0].mxu0 %v1591
        %v1630 = vpop.f32.mrb[0].mxu0
        %v1631 = vadd.f32 0.0, %v1630
        %v1632 = vpop.f32.mrb[0].mxu0
        %v1633 = vpop.f32.mrb[0].mxu0
        %v1634 = vpop.f32.mrb[0].mxu0
        %1635 = vdwg.mxu0
        %v1636 = vadd.f32 %v1586, %v1631
        %s1637 = scalar_lea.vmem %s6, 12
        %v1638 = vld [vmem:[%s1637] sm:$0x3]
        %v1639 = vrot.slane %v1338, 3
        %v1641 = vsel %vm826, %v1639, 0
        %v1644 = vsel %vm830, %v1638, 0
        %1646 = vmatprep.subr.bf16.mxu0 0
        %1647 = vmatpush1.bf16.msra.mxu0 %v1644
        %1648 = vmatprep.subr.bf16.mxu0 0
        %1649 = vmatpush1.bf16.msra.mxu0 0
        %1650 = vmatprep.subr.bf16.mxu0 0
        %1651 = vmatpush1.bf16.msra.mxu0 0
        %1652 = vmatprep.subr.bf16.mxu0 0
        %1653 = vmatpush1.bf16.msra.mxu0 0
        %1654 = vmatprep.subr.bf16.mxu0 0
        %1655 = vmatpush1.bf16.msra.mxu0 0
        %1656 = vmatprep.subr.bf16.mxu0 0
        %1657 = vmatpush1.bf16.msra.mxu0 0
        %1658 = vmatprep.subr.bf16.mxu0 0
        %1659 = vmatpush1.bf16.msra.mxu0 0
        %1660 = vmatprep.subr.bf16.mxu0 0
        %1661 = vmatpush1.bf16.msra.mxu0 0
        %1662 = vmatprep.subr.bf16.mxu0 0
        %1663 = vmatpush1.bf16.msra.mxu0 0
        %1664 = vmatprep.subr.bf16.mxu0 0
        %1665 = vmatpush1.bf16.msra.mxu0 0
        %1666 = vmatprep.subr.bf16.mxu0 0
        %1667 = vmatpush1.bf16.msra.mxu0 0
        %1668 = vmatprep.subr.bf16.mxu0 0
        %1669 = vmatpush1.bf16.msra.mxu0 0
        %1670 = vmatprep.subr.bf16.mxu0 0
        %1671 = vmatpush1.bf16.msra.mxu0 0
        %1672 = vmatprep.subr.bf16.mxu0 0
        %1673 = vmatpush1.bf16.msra.mxu0 0
        %1674 = vmatprep.subr.bf16.mxu0 0
        %1675 = vmatpush1.bf16.msra.mxu0 0
        %1676 = vmatprep.subr.bf16.mxu0 0
        %1677 = vmatpush1.bf16.msra.mxu0 0
        %1678 = vmatprep.mubr.bf16.mxu0 0
        %1679 = vmatmul.mubr.bf16.gmra.mrb[0].mxu0 %v1641
        %v1680 = vpop.f32.mrb[0].mxu0
        %v1681 = vadd.f32 0.0, %v1680
        %v1682 = vpop.f32.mrb[0].mxu0
        %v1683 = vpop.f32.mrb[0].mxu0
        %v1684 = vpop.f32.mrb[0].mxu0
        %1685 = vdwg.mxu0
        %v1686 = vadd.f32 %v1636, %v1681
        %s1687 = scalar_lea.vmem %s6, 14
        %v1688 = vld [vmem:[%s1687] sm:$0x3]
        %v1689 = vrot.slane %v1343, 3
        %v1691 = vsel %vm826, %v1689, 0
        %v1694 = vsel %vm830, %v1688, 0
        %1696 = vmatprep.subr.bf16.mxu0 0
        %1697 = vmatpush1.bf16.msra.mxu0 %v1694
        %1698 = vmatprep.subr.bf16.mxu0 0
        %1699 = vmatpush1.bf16.msra.mxu0 0
        %1700 = vmatprep.subr.bf16.mxu0 0
        %1701 = vmatpush1.bf16.msra.mxu0 0
        %1702 = vmatprep.subr.bf16.mxu0 0
        %1703 = vmatpush1.bf16.msra.mxu0 0
        %1704 = vmatprep.subr.bf16.mxu0 0
        %1705 = vmatpush1.bf16.msra.mxu0 0
        %1706 = vmatprep.subr.bf16.mxu0 0
        %1707 = vmatpush1.bf16.msra.mxu0 0
        %1708 = vmatprep.subr.bf16.mxu0 0
        %1709 = vmatpush1.bf16.msra.mxu0 0
        %1710 = vmatprep.subr.bf16.mxu0 0
        %1711 = vmatpush1.bf16.msra.mxu0 0
        %1712 = vmatprep.subr.bf16.mxu0 0
        %1713 = vmatpush1.bf16.msra.mxu0 0
        %1714 = vmatprep.subr.bf16.mxu0 0
        %1715 = vmatpush1.bf16.msra.mxu0 0
        %1716 = vmatprep.subr.bf16.mxu0 0
        %1717 = vmatpush1.bf16.msra.mxu0 0
        %1718 = vmatprep.subr.bf16.mxu0 0
        %1719 = vmatpush1.bf16.msra.mxu0 0
        %1720 = vmatprep.subr.bf16.mxu0 0
        %1721 = vmatpush1.bf16.msra.mxu0 0
        %1722 = vmatprep.subr.bf16.mxu0 0
        %1723 = vmatpush1.bf16.msra.mxu0 0
        %1724 = vmatprep.subr.bf16.mxu0 0
        %1725 = vmatpush1.bf16.msra.mxu0 0
        %1726 = vmatprep.subr.bf16.mxu0 0
        %1727 = vmatpush1.bf16.msra.mxu0 0
        %1728 = vmatprep.mubr.bf16.mxu0 0
        %1729 = vmatmul.mubr.bf16.gmra.mrb[0].mxu0 %v1691
        %v1730 = vpop.f32.mrb[0].mxu0
        %v1731 = vadd.f32 0.0, %v1730
        %v1732 = vpop.f32.mrb[0].mxu0
        %v1733 = vpop.f32.mrb[0].mxu0
        %v1734 = vpop.f32.mrb[0].mxu0
        %1735 = vdwg.mxu0
        %v1736 = vadd.f32 %v1686, %v1731
        %v1737 = vpack.c.bf16 %v1337, %v1337
        %s1738 = scalar_lea.vmem %s6, 16
        %v1739 = vld [vmem:[%s1738] sm:$0x3]
        %v1741 = vsel %vm826, %v1737, 0
        %v1744 = vsel %vm830, %v1739, 0
        %1746 = vmatprep.subr.bf16.mxu0 0
        %1747 = vmatpush1.bf16.msra.mxu0 %v1744
        %1748 = vmatprep.subr.bf16.mxu0 0
        %1749 = vmatpush1.bf16.msra.mxu0 0
        %1750 = vmatprep.subr.bf16.mxu0 0
        %1751 = vmatpush1.bf16.msra.mxu0 0
        %1752 = vmatprep.subr.bf16.mxu0 0
        %1753 = vmatpush1.bf16.msra.mxu0 0
        %1754 = vmatprep.subr.bf16.mxu0 0
        %1755 = vmatpush1.bf16.msra.mxu0 0
        %1756 = vmatprep.subr.bf16.mxu0 0
        %1757 = vmatpush1.bf16.msra.mxu0 0
        %1758 = vmatprep.subr.bf16.mxu0 0
        %1759 = vmatpush1.bf16.msra.mxu0 0
        %1760 = vmatprep.subr.bf16.mxu0 0
        %1761 = vmatpush1.bf16.msra.mxu0 0
        %1762 = vmatprep.subr.bf16.mxu0 0
        %1763 = vmatpush1.bf16.msra.mxu0 0
        %1764 = vmatprep.subr.bf16.mxu0 0
        %1765 = vmatpush1.bf16.msra.mxu0 0
        %1766 = vmatprep.subr.bf16.mxu0 0
        %1767 = vmatpush1.bf16.msra.mxu0 0
        %1768 = vmatprep.subr.bf16.mxu0 0
        %1769 = vmatpush1.bf16.msra.mxu0 0
        %1770 = vmatprep.subr.bf16.mxu0 0
        %1771 = vmatpush1.bf16.msra.mxu0 0
        %1772 = vmatprep.subr.bf16.mxu0 0
        %1773 = vmatpush1.bf16.msra.mxu0 0
        %1774 = vmatprep.subr.bf16.mxu0 0
        %1775 = vmatpush1.bf16.msra.mxu0 0
        %1776 = vmatprep.subr.bf16.mxu0 0
        %1777 = vmatpush1.bf16.msra.mxu0 0
        %1778 = vmatprep.mubr.bf16.mxu0 0
        %1779 = vmatmul.mubr.bf16.gmra.mrb[0].mxu0 %v1741
        %v1780 = vpop.f32.mrb[0].mxu0
        %v1781 = vadd.f32 0.0, %v1780
        %v1782 = vpop.f32.mrb[0].mxu0
        %v1783 = vpop.f32.mrb[0].mxu0
        %v1784 = vpop.f32.mrb[0].mxu0
        %1785 = vdwg.mxu0
        %v1786 = vadd.f32 %v1736, %v1781
        %v1787 = vld [vmem:[%s7] sm:$0x1]
        %v1788 = vadd.f32 %v1786, %v1787
        %vm1789 = vcmp.ge.f32.partialorder %v1788, 0.0
        %v1790 = vld [vmem:[%s8] sm:$0x1]
        %v1791 = vmul.f32 %v1790, %v1788
        %v1792 = vsel %vm1789, %v1788, %v1791
        %v1793 = vpack.c.bf16 %v1792, %v1792
        %v1794 = vld [vmem:[%s9] sm:$0x3]
        %v1795 = vld [vmem:[%s10] sm:$0x1]
        %v1797 = vsel %vm826, %v1793, 0
        %v1800 = vsel %vm830, %v1794, 0
        %1802 = vmatprep.subr.bf16.mxu0 0
        %1803 = vmatpush1.bf16.msra.mxu0 %v1800
        %1804 = vmatprep.subr.bf16.mxu0 0
        %1805 = vmatpush1.bf16.msra.mxu0 0
        %1806 = vmatprep.subr.bf16.mxu0 0
        %1807 = vmatpush1.bf16.msra.mxu0 0
        %1808 = vmatprep.subr.bf16.mxu0 0
        %1809 = vmatpush1.bf16.msra.mxu0 0
        %1810 = vmatprep.subr.bf16.mxu0 0
        %1811 = vmatpush1.bf16.msra.mxu0 0
        %1812 = vmatprep.subr.bf16.mxu0 0
        %1813 = vmatpush1.bf16.msra.mxu0 0
        %1814 = vmatprep.subr.bf16.mxu0 0
        %1815 = vmatpush1.bf16.msra.mxu0 0
        %1816 = vmatprep.subr.bf16.mxu0 0
        %1817 = vmatpush1.bf16.msra.mxu0 0
        %1818 = vmatprep.subr.bf16.mxu0 0
        %1819 = vmatpush1.bf16.msra.mxu0 0
        %1820 = vmatprep.subr.bf16.mxu0 0
        %1821 = vmatpush1.bf16.msra.mxu0 0
        %1822 = vmatprep.subr.bf16.mxu0 0
        %1823 = vmatpush1.bf16.msra.mxu0 0
        %1824 = vmatprep.subr.bf16.mxu0 0
        %1825 = vmatpush1.bf16.msra.mxu0 0
        %1826 = vmatprep.subr.bf16.mxu0 0
        %1827 = vmatpush1.bf16.msra.mxu0 0
        %1828 = vmatprep.subr.bf16.mxu0 0
        %1829 = vmatpush1.bf16.msra.mxu0 0
        %1830 = vmatprep.subr.bf16.mxu0 0
        %1831 = vmatpush1.bf16.msra.mxu0 0
        %1832 = vmatprep.subr.bf16.mxu0 0
        %1833 = vmatpush1.bf16.msra.mxu0 0
        %1834 = vmatprep.mubr.bf16.mxu0 0
        %1835 = vmatmul.mubr.bf16.gmra.mrb[0].mxu0 %v1797
        %v1836 = vpop.f32.mrb[0].mxu0
        %v1837 = vadd.f32 %v1795, %v1836
        %v1838 = vpop.f32.mrb[0].mxu0
        %v1839 = vpop.f32.mrb[0].mxu0
        %v1840 = vpop.f32.mrb[0].mxu0
        %1841 = vdwg.mxu0
        %vm1842 = vcmp.ge.f32.partialorder %v1837, 0.0
        %v1843 = vld [vmem:[%s11] sm:$0x1]
        %v1844 = vmul.f32 %v1843, %v1837
        %v1845 = vsel %vm1842, %v1837, %v1844
        %v1846 = vpack.c.bf16 %v1845, %v1845
        %v1847 = vld [vmem:[%s12] sm:$0x3]
        %v1848 = vld [vmem:[%s13] sm:$0x1]
        %v1850 = vsel %vm826, %v1846, 0
        %v1853 = vsel %vm830, %v1847, 0
        %1855 = vmatprep.subr.bf16.mxu0 0
        %1856 = vmatpush1.bf16.msra.mxu0 %v1853
        %1857 = vmatprep.subr.bf16.mxu0 0
        %1858 = vmatpush1.bf16.msra.mxu0 0
        %1859 = vmatprep.subr.bf16.mxu0 0
        %1860 = vmatpush1.bf16.msra.mxu0 0
        %1861 = vmatprep.subr.bf16.mxu0 0
        %1862 = vmatpush1.bf16.msra.mxu0 0
        %1863 = vmatprep.subr.bf16.mxu0 0
        %1864 = vmatpush1.bf16.msra.mxu0 0
        %1865 = vmatprep.subr.bf16.mxu0 0
        %1866 = vmatpush1.bf16.msra.mxu0 0
        %1867 = vmatprep.subr.bf16.mxu0 0
        %1868 = vmatpush1.bf16.msra.mxu0 0
        %1869 = vmatprep.subr.bf16.mxu0 0
        %1870 = vmatpush1.bf16.msra.mxu0 0
        %1871 = vmatprep.subr.bf16.mxu0 0
        %1872 = vmatpush1.bf16.msra.mxu0 0
        %1873 = vmatprep.subr.bf16.mxu0 0
        %1874 = vmatpush1.bf16.msra.mxu0 0
        %1875 = vmatprep.subr.bf16.mxu0 0
        %1876 = vmatpush1.bf16.msra.mxu0 0
        %1877 = vmatprep.subr.bf16.mxu0 0
        %1878 = vmatpush1.bf16.msra.mxu0 0
        %1879 = vmatprep.subr.bf16.mxu0 0
        %1880 = vmatpush1.bf16.msra.mxu0 0
        %1881 = vmatprep.subr.bf16.mxu0 0
        %1882 = vmatpush1.bf16.msra.mxu0 0
        %1883 = vmatprep.subr.bf16.mxu0 0
        %1884 = vmatpush1.bf16.msra.mxu0 0
        %1885 = vmatprep.subr.bf16.mxu0 0
        %1886 = vmatpush1.bf16.msra.mxu0 0
        %1887 = vmatprep.mubr.bf16.mxu0 0
        %1888 = vmatmul.mubr.bf16.gmra.mrb[0].mxu0 %v1850
        %v1889 = vpop.f32.mrb[0].mxu0
        %v1890 = vadd.f32 %v1848, %v1889
        %v1891 = vpop.f32.mrb[0].mxu0
        %v1892 = vpop.f32.mrb[0].mxu0
        %v1893 = vpop.f32.mrb[0].mxu0
        %1894 = vdwg.mxu0
        %v1895 = vxor.u32 %v1890, 2147483648
        %v1896 = vmul.f32 %v1895, 1.442695
        %v1897 = vpow.pop %v1896
        %v1898 = vadd.f32 %v1897, 1.0
        %v1899 = vrcp.pop %v1898
        %v1900 = vmul.f32 1.0, %v1899
        %vm1901 = vcmask 24576
        %1902 = vst.msk [vmem:[%s459] sm:$0x1] %vm1901, %v1900
        %s1903 = sand.u32 %s335, 1
        %s1904 = scalar_lea.sflag [#allocation3], %s1903
        %s1905 = sand.u32 %s335, 1
        %s1906 = scalar_lea.vmem [#allocation2], %s1905
        // Predicated region
        $region77: #{tpu_custom_call.1} parent=75 // pred_check
          %p1907 = pneg %p345
        $region78: #{tpu_custom_call.1} parent=75 // pred_check_branch
          %1909 = sbr.rel (%p1907) target = $region80
        $region79: #{tpu_custom_call.1} parent=75 // pred_region
          %s1911 = ssub.s32 16, 16
          %1912 = vsyncadd %s1904, %s1911
          %s1913 = smul.addr %s28, 16
          %s1914 = scalar_lea.hbm %s14, %s1913
          %s1916 = sshll.u32 %s1906, 4
          %s1917 = int_to_ptr.vmem [resolvable:$true] %s1916
          %1919 = dma.vmem_to_hbm [thread:$0]  %s1917, 16, %s1914, %s1904
        $region80: #{tpu_custom_call.1} parent=75 // pred_fallthru
          _
      $region76: #{tpu_custom_call.1} parent=5 // pred_fallthru
        _
      %p1920 = scmp.le.s32.totalorder 2, %s23
      // Predicated region
      $region81: #{tpu_custom_call.1} parent=5 // pred_check
        %p1921 = pneg %p1920
      $region82: #{tpu_custom_call.1} parent=5 // pred_check_branch
        %1923 = sbr.rel (%p1921) target = $region84
      $region83: #{tpu_custom_call.1} parent=5 // pred_region
        %s1924 = ssub.s32 %s23, 2
        // Predicated region
        $region85: #{tpu_custom_call.1} parent=83 // pred_check
          %p1925 = pneg %p351
        $region86: #{tpu_custom_call.1} parent=83 // pred_check_branch
          %1927 = sbr.rel (%p1925) target = $region88
        $region87: #{tpu_custom_call.1} parent=83 // pred_region
          %s1928 = sand.u32 %s336, 1
          %s1929 = scalar_lea.sflag [#allocation3], %s1928
          %s1930 = sand.u32 %s336, 1
          %s1931 = scalar_lea.vmem [#allocation2], %s1930
          %1932 = dma.done %s1929, 16
        $region88: #{tpu_custom_call.1} parent=83 // pred_fallthru
          _
      $region84: #{tpu_custom_call.1} parent=5 // pred_fallthru
        _
    $region6: #{tpu_custom_call.1} parent=1 // loop_footer
      %s27 = sadd.s32 1, %s23
    $region7: #{tpu_custom_call.1} parent=1 // loop_footer_branch
      %22 = sbr.rel target = $region3
    $region8: #{tpu_custom_call.1} parent=1 // loop_exit
      _
    %1933 = vsyncpa [#allocation3], 1
    %s1934 = scalar_lea.sflag [#allocation3], 1
    %1935 = vsyncpa %s1934, 1

</llo_original>
